<compile_context>
chip_gen: v7x
topology: tpu7x:2x2x1
jax: 0.10.0
libtpu: 0.0.40
codegen_flags: <defaults>
</compile_context>

<pallas_src>
import jax
import jax.numpy as jnp
from jax import lax
from jax.experimental import pallas as pl
from jax.experimental.pallas import tpu as pltpu
import numpy as np


def fused_bigru_sum_kernel(xcat_ref, w_in_ref, b_in_ref, w_hh_ref, b_hn_ref,
                           out_ref, gi_ref):
    """Fused bidirectional GRU + sum over time.

    xcat_ref: (T*B, 2F)  row t*B+b = [x[t, b, :], x[T-1-t, b, :]]
    w_in_ref: (2F, 6H)   fused input weights, cols [r_f r_b | z_f z_b | n_f n_b];
                         rows [:F] feed forward cols, rows [F:] feed backward cols
    b_in_ref: (1, 6H)    b_ih (+ b_hh folded in for the r/z gates), same layout
    w_hh_ref: (2H, 6H)   block-diagonal fused recurrent weights
                         (rows [:H] = forward h, rows [H:] = backward h)
    b_hn_ref: (1, 2H)    recurrent bias of the n gate only, [b_hn_f | b_hn_b]
    out_ref : (B, 2H)    [sum_t h_fwd | sum_t h_bwd]
    gi_ref  : (T*B, 6H)  VMEM scratch for the precomputed input projection
    """
    TB = gi_ref.shape[0]
    B, H2 = out_ref.shape           # B, 2H
    T = TB // B
    H6 = w_hh_ref.shape[1]          # 6H

    # ---- Hoisted, non-recurrent work -------------------------------------
    # One batched MXU matmul produces gate pre-activations for BOTH directions
    # and ALL timesteps, already time-aligned for the fused recurrence.
    gi_ref[...] = (
        jnp.dot(xcat_ref[...], w_in_ref[...],
                preferred_element_type=jnp.float32)
        + b_in_ref[...]
    )

    w_hh = w_hh_ref[...]
    # Hoist the n-gate recurrent-bias broadcast out of the loop (no CSE in JAX).
    b_hn = jnp.broadcast_to(b_hn_ref[...], (B, H2))
    h0 = jnp.zeros((B, H2), jnp.float32)

    # ---- Fused forward+backward recurrence --------------------------------
    def step(t, carry):
        h, acc = carry
        off = pl.multiple_of(t * B, B)
        gi = gi_ref[pl.ds(off, B), :]                       # (B, 6H), one load

        # Single combined recurrent matmul per step for both directions.
        gh = jnp.dot(h, w_hh, preferred_element_type=jnp.float32)

        r = jax.nn.sigmoid(gi[:, :H2] + gh[:, :H2])
        z = jax.nn.sigmoid(gi[:, H2:2 * H2] + gh[:, H2:2 * H2])
        n = jnp.tanh(gi[:, 2 * H2:] + r * (gh[:, 2 * H2:] + b_hn))
        h_new = (1.0 - z) * n + z * h
        return h_new, acc + h_new

    _, acc = lax.fori_loop(0, T, step, (h0, h0), unroll=True)

    # acc is already [fwd_sum | bwd_sum]: direct store, no concatenate copy.
    out_ref[...] = acc


def _fuse_gru_params(w_ih_f, w_hh_f, b_ih_f, b_hh_f,
                     w_ih_b, w_hh_b, b_ih_b, b_hh_b):
    """Rearrange PyTorch-layout GRU weights into the kernel's fused layout."""
    H = w_hh_f.shape[1]
    F = w_ih_f.shape[1]
    f32 = jnp.float32

    def gate(a, g):                       # slice gate g out of a (..., 3H) array
        return a[..., g * H:(g + 1) * H]

    # Input weights: (2F, 6H).  Top F rows (features of x[t]) -> forward gate
    # columns; bottom F rows (features of x[T-1-t]) -> backward gate columns.
    wf, wb = w_ih_f.T, w_ih_b.T           # (F, 3H)
    zF = jnp.zeros((F, H), f32)
    w_in_top = jnp.concatenate(
        [blk for g in range(3) for blk in (gate(wf, g), zF)], axis=-1)
    w_in_bot = jnp.concatenate(
        [blk for g in range(3) for blk in (zF, gate(wb, g))], axis=-1)
    w_in = jnp.concatenate([w_in_top, w_in_bot], axis=0)        # (2F, 6H)

    # Input-side bias; r/z gates also absorb the recurrent bias (additive).
    b_cols = []
    for g in range(3):
        bf = gate(b_ih_f, g) + (gate(b_hh_f, g) if g < 2 else 0.0)
        bb = gate(b_ih_b, g) + (gate(b_hh_b, g) if g < 2 else 0.0)
        b_cols += [bf, bb]
    b_in = jnp.concatenate(b_cols, axis=-1)[None, :]            # (1, 6H)

    # n-gate recurrent bias stays on the serial path (multiplied by r).
    b_hn = jnp.concatenate([gate(b_hh_f, 2), gate(b_hh_b, 2)],
                           axis=-1)[None, :]                    # (1, 2H)

    # Recurrent weights: block-diagonal per gate, (2H, 6H).
    hf, hb = w_hh_f.T, w_hh_b.T           # (H, 3H)
    zH = jnp.zeros((H, H), f32)
    blocks = []
    for g in range(3):
        top = jnp.concatenate([gate(hf, g), zH], axis=1)
        bot = jnp.concatenate([zH, gate(hb, g)], axis=1)
        blocks.append(jnp.concatenate([top, bot], axis=0))      # (2H, 2H)
    w_hh = jnp.concatenate(blocks, axis=1)                      # (2H, 6H)

    return w_in, b_in, w_hh, b_hn


def graphsage_bigru_forward(x, adj, torch_params):
    """Wrapper: adj is unused (matches the PyTorch module's forward)."""
    del adj
    T, B, F = x.shape
    H = torch_params["w_hh_f"].shape[1]

    w_in, b_in, w_hh, b_hn = _fuse_gru_params(
        torch_params["w_ih_f"], torch_params["w_hh_f"],
        torch_params["b_ih_f"], torch_params["b_hh_f"],
        torch_params["w_ih_b"], torch_params["w_hh_b"],
        torch_params["b_ih_b"], torch_params["b_hh_b"])

    # Pair x[t] with x[T-1-t] feature-wise so one in-kernel matmul gives
    # time-aligned forward AND backward gate pre-activations (no per-step
    # select / double load inside the serialized recurrence).
    x_cat = jnp.concatenate([x, x[::-1]], axis=-1).reshape(T * B, 2 * F)

    vmem = pl.BlockSpec(memory_space=pltpu.MemorySpace.VMEM)
    return pl.pallas_call(
        fused_bigru_sum_kernel,
        out_shape=jax.ShapeDtypeStruct((B, 2 * H), jnp.float32),
        in_specs=[vmem] * 5,
        out_specs=vmem,
        scratch_shapes=[pltpu.VMEM((T * B, 6 * H), jnp.float32)],
    )(x_cat, w_in, b_in, w_hh, b_hn)


def ref_bigru_sum(x, p):
    """Pure-JAX reference (PyTorch weight layout) for correctness check."""
    T, B, F = x.shape
    H = p["w_hh_f"].shape[1]

    def cell(x_t, h, w_ih, w_hh, b_ih, b_hh):
        gi = x_t @ w_ih.T + b_ih
        gh = h @ w_hh.T + b_hh
        i_r, i_z, i_n = jnp.split(gi, 3, axis=-1)
        h_r, h_z, h_n = jnp.split(gh, 3, axis=-1)
        r = jax.nn.sigmoid(i_r + h_r)
        z = jax.nn.sigmoid(i_z + h_z)
        n = jnp.tanh(i_n + r * h_n)
        return (1.0 - z) * n + z * h

    def run(xs, w_ih, w_hh, b_ih, b_hh):
        def body(h, x_t):
            h_new = cell(x_t, h, w_ih, w_hh, b_ih, b_hh)
            return h_new, h_new
        _, hs = lax.scan(body, jnp.zeros((B, H), jnp.float32), xs)
        return hs

    fwd = run(x, p["w_ih_f"], p["w_hh_f"], p["b_ih_f"], p["b_hh_f"])
    bwd = run(x[::-1], p["w_ih_b"], p["w_hh_b"], p["b_ih_b"], p["b_hh_b"])[::-1]
    h = jnp.concatenate([fwd, bwd], axis=-1)    # (T, B, 2H)
    return jnp.sum(h, axis=0)                   # (B, 2H)


if __name__ == "__main__":
    # seq T=8, batch B=8, in_features F=16, hidden (out_features) H=32.
    T, B, F, H = 8, 8, 16, 32

    key = jax.random.PRNGKey(0)
    keys = jax.random.split(key, 10)
    k = 1.0 / np.sqrt(H)   # PyTorch GRU init: U(-1/sqrt(H), 1/sqrt(H))

    def unif(kk, shape):
        return jax.random.uniform(kk, shape, jnp.float32, minval=-k, maxval=k)

    # Deterministic synthetic parameters in PyTorch layout (gate order r,z,n).
    torch_params = dict(
        w_ih_f=unif(keys[0], (3 * H, F)),
        w_hh_f=unif(keys[1], (3 * H, H)),
        b_ih_f=unif(keys[2], (3 * H,)),
        b_hh_f=unif(keys[3], (3 * H,)),
        w_ih_b=unif(keys[4], (3 * H, F)),
        w_hh_b=unif(keys[5], (3 * H, H)),
        b_ih_b=unif(keys[6], (3 * H,)),
        b_hh_b=unif(keys[7], (3 * H,)),
    )

    x = jax.random.normal(keys[8], (T, B, F), jnp.float32)
    adj = jax.random.normal(keys[9], (B, B), jnp.float32)  # unused by forward

    out = graphsage_bigru_forward(x, adj, torch_params)
    out = jax.block_until_ready(out)

    ref = ref_bigru_sum(x, torch_params)
    assert out.shape == (B, 2 * H)
    assert np.allclose(np.asarray(out), np.asarray(ref), rtol=1e-4, atol=1e-4), \
        "Pallas kernel output does not match JAX reference"

    print("KERNEL_OK")
</pallas_src>

<mosaic_0001>
module attributes {stable_mosaic.version = 11 : i64} {
  func.func @fused_bigru_sum_kernel(%arg0: memref<64x32xf32, #tpu.memory_space<vmem>>, %arg1: memref<32x192xf32, #tpu.memory_space<vmem>>, %arg2: memref<1x192xf32, #tpu.memory_space<vmem>>, %arg3: memref<64x192xf32, #tpu.memory_space<vmem>>, %arg4: memref<1x64xf32, #tpu.memory_space<vmem>>, %arg5: memref<8x64xf32, #tpu.memory_space<vmem>>, %arg6: memref<64x192xf32, #tpu.memory_space<vmem>>) attributes {dimension_semantics = [], scalar_prefetch = 0 : i64, scratch_operands = 1 : i64, tpu.core_type = #tpu.core_type<tc>} {
    %c0 = arith.constant 0 : index
    %c0_0 = arith.constant 0 : index
    %0 = vector.load %arg0[%c0, %c0_0] : memref<64x32xf32, #tpu.memory_space<vmem>>, vector<64x32xf32>
    %c0_1 = arith.constant 0 : index
    %c0_2 = arith.constant 0 : index
    %1 = vector.load %arg1[%c0_1, %c0_2] : memref<32x192xf32, #tpu.memory_space<vmem>>, vector<32x192xf32>
    %cst = arith.constant dense<0.000000e+00> : vector<64x192xf32>
    %2 = tpu.matmul %0, %1, %cst {dimension_numbers = #tpu.dot_dimension_numbers<[1], [0], [0], [1], [0, 0, 1, 1], [], []>} : vector<64x32xf32>, vector<32x192xf32>, vector<64x192xf32> -> vector<64x192xf32>
    %c0_3 = arith.constant 0 : index
    %c0_4 = arith.constant 0 : index
    %3 = vector.load %arg2[%c0_3, %c0_4] : memref<1x192xf32, #tpu.memory_space<vmem>>, vector<1x192xf32>
    %4 = vector.broadcast %3 : vector<1x192xf32> to vector<64x192xf32>
    %5 = arith.addf %2, %4 : vector<64x192xf32>
    %c0_5 = arith.constant 0 : index
    %c0_6 = arith.constant 0 : index
    %6 = vector.load %arg6[%c0_5, %c0_6] : memref<64x192xf32, #tpu.memory_space<vmem>>, vector<64x192xf32>
    tpu.vector_store %arg6[%c0_5, %c0_6], %5 {strides = array<i32>} : memref<64x192xf32, #tpu.memory_space<vmem>>, vector<64x192xf32>,
    %c0_7 = arith.constant 0 : index
    %c0_8 = arith.constant 0 : index
    %7 = vector.load %arg3[%c0_7, %c0_8] : memref<64x192xf32, #tpu.memory_space<vmem>>, vector<64x192xf32>
    %c0_9 = arith.constant 0 : index
    %c0_10 = arith.constant 0 : index
    %8 = vector.load %arg4[%c0_9, %c0_10] : memref<1x64xf32, #tpu.memory_space<vmem>>, vector<1x64xf32>
    %9 = vector.shape_cast %8 : vector<1x64xf32> to vector<1x64xf32>
    %10 = vector.broadcast %9 : vector<1x64xf32> to vector<8x64xf32>
    %cst_11 = arith.constant 0.000000e+00 : f32
    %11 = vector.broadcast %cst_11 : f32 to vector<8x64xf32>
    %c0_i32 = arith.constant 0 : i32
    %c8_i32 = arith.constant 8 : i32
    %12 = arith.muli %c0_i32, %c8_i32 : i32
    %13 = tpu.assume_multiple %12, 8 : i32
    %14 = arith.index_cast %13 : i32 to index
    %c0_12 = arith.constant 0 : index
    %15 = vector.load %arg6[%14, %c0_12] : memref<64x192xf32, #tpu.memory_space<vmem>>, vector<8x192xf32>
    %cst_13 = arith.constant dense<0.000000e+00> : vector<8x192xf32>
    %16 = tpu.matmul %11, %7, %cst_13 {dimension_numbers = #tpu.dot_dimension_numbers<[1], [0], [0], [1], [0, 0, 1, 1], [], []>} : vector<8x64xf32>, vector<64x192xf32>, vector<8x192xf32> -> vector<8x192xf32>
    %17 = vector.extract_strided_slice %15 {offsets = [0, 0], sizes = [8, 64], strides = [1, 1]} : vector<8x192xf32> to vector<8x64xf32>
    %18 = vector.extract_strided_slice %16 {offsets = [0, 0], sizes = [8, 64], strides = [1, 1]} : vector<8x192xf32> to vector<8x64xf32>
    %19 = arith.addf %17, %18 : vector<8x64xf32>
    %20 = arith.negf %19 : vector<8x64xf32>
    %21 = math.exp %20 : vector<8x64xf32>
    %cst_14 = arith.constant 1.000000e+00 : f32
    %22 = vector.broadcast %cst_14 : f32 to vector<8x64xf32>
    %23 = arith.addf %22, %21 : vector<8x64xf32>
    %24 = arith.divf %22, %23 : vector<8x64xf32>
    %25 = vector.extract_strided_slice %15 {offsets = [0, 64], sizes = [8, 64], strides = [1, 1]} : vector<8x192xf32> to vector<8x64xf32>
    %26 = vector.extract_strided_slice %16 {offsets = [0, 64], sizes = [8, 64], strides = [1, 1]} : vector<8x192xf32> to vector<8x64xf32>
    %27 = arith.addf %25, %26 : vector<8x64xf32>
    %28 = arith.negf %27 : vector<8x64xf32>
    %29 = math.exp %28 : vector<8x64xf32>
    %cst_15 = arith.constant 1.000000e+00 : f32
    %30 = vector.broadcast %cst_15 : f32 to vector<8x64xf32>
    %31 = arith.addf %30, %29 : vector<8x64xf32>
    %32 = arith.divf %30, %31 : vector<8x64xf32>
    %33 = vector.extract_strided_slice %15 {offsets = [0, 128], sizes = [8, 64], strides = [1, 1]} : vector<8x192xf32> to vector<8x64xf32>
    %34 = vector.extract_strided_slice %16 {offsets = [0, 128], sizes = [8, 64], strides = [1, 1]} : vector<8x192xf32> to vector<8x64xf32>
    %35 = arith.addf %34, %10 : vector<8x64xf32>
    %36 = arith.mulf %24, %35 : vector<8x64xf32>
    %37 = arith.addf %33, %36 : vector<8x64xf32>
    %38 = math.tanh %37 : vector<8x64xf32>
    %cst_16 = arith.constant 1.000000e+00 : f32
    %39 = vector.broadcast %cst_16 : f32 to vector<8x64xf32>
    %40 = arith.subf %39, %32 : vector<8x64xf32>
    %41 = arith.mulf %40, %38 : vector<8x64xf32>
    %42 = arith.mulf %32, %11 : vector<8x64xf32>
    %43 = arith.addf %41, %42 : vector<8x64xf32>
    %44 = arith.addf %11, %43 : vector<8x64xf32>
    %c1_i32 = arith.constant 1 : i32
    %c8_i32_17 = arith.constant 8 : i32
    %45 = arith.muli %c1_i32, %c8_i32_17 : i32
    %46 = tpu.assume_multiple %45, 8 : i32
    %47 = arith.index_cast %46 : i32 to index
    %c0_18 = arith.constant 0 : index
    %48 = vector.load %arg6[%47, %c0_18] : memref<64x192xf32, #tpu.memory_space<vmem>>, vector<8x192xf32>
    %cst_19 = arith.constant dense<0.000000e+00> : vector<8x192xf32>
    %49 = tpu.matmul %43, %7, %cst_19 {dimension_numbers = #tpu.dot_dimension_numbers<[1], [0], [0], [1], [0, 0, 1, 1], [], []>} : vector<8x64xf32>, vector<64x192xf32>, vector<8x192xf32> -> vector<8x192xf32>
    %50 = vector.extract_strided_slice %48 {offsets = [0, 0], sizes = [8, 64], strides = [1, 1]} : vector<8x192xf32> to vector<8x64xf32>
    %51 = vector.extract_strided_slice %49 {offsets = [0, 0], sizes = [8, 64], strides = [1, 1]} : vector<8x192xf32> to vector<8x64xf32>
    %52 = arith.addf %50, %51 : vector<8x64xf32>
    %53 = arith.negf %52 : vector<8x64xf32>
    %54 = math.exp %53 : vector<8x64xf32>
    %cst_20 = arith.constant 1.000000e+00 : f32
    %55 = vector.broadcast %cst_20 : f32 to vector<8x64xf32>
    %56 = arith.addf %55, %54 : vector<8x64xf32>
    %57 = arith.divf %55, %56 : vector<8x64xf32>
    %58 = vector.extract_strided_slice %48 {offsets = [0, 64], sizes = [8, 64], strides = [1, 1]} : vector<8x192xf32> to vector<8x64xf32>
    %59 = vector.extract_strided_slice %49 {offsets = [0, 64], sizes = [8, 64], strides = [1, 1]} : vector<8x192xf32> to vector<8x64xf32>
    %60 = arith.addf %58, %59 : vector<8x64xf32>
    %61 = arith.negf %60 : vector<8x64xf32>
    %62 = math.exp %61 : vector<8x64xf32>
    %cst_21 = arith.constant 1.000000e+00 : f32
    %63 = vector.broadcast %cst_21 : f32 to vector<8x64xf32>
    %64 = arith.addf %63, %62 : vector<8x64xf32>
    %65 = arith.divf %63, %64 : vector<8x64xf32>
    %66 = vector.extract_strided_slice %48 {offsets = [0, 128], sizes = [8, 64], strides = [1, 1]} : vector<8x192xf32> to vector<8x64xf32>
    %67 = vector.extract_strided_slice %49 {offsets = [0, 128], sizes = [8, 64], strides = [1, 1]} : vector<8x192xf32> to vector<8x64xf32>
    %68 = arith.addf %67, %10 : vector<8x64xf32>
    %69 = arith.mulf %57, %68 : vector<8x64xf32>
    %70 = arith.addf %66, %69 : vector<8x64xf32>
    %71 = math.tanh %70 : vector<8x64xf32>
    %cst_22 = arith.constant 1.000000e+00 : f32
    %72 = vector.broadcast %cst_22 : f32 to vector<8x64xf32>
    %73 = arith.subf %72, %65 : vector<8x64xf32>
    %74 = arith.mulf %73, %71 : vector<8x64xf32>
    %75 = arith.mulf %65, %43 : vector<8x64xf32>
    %76 = arith.addf %74, %75 : vector<8x64xf32>
    %77 = arith.addf %44, %76 : vector<8x64xf32>
    %c2_i32 = arith.constant 2 : i32
    %c8_i32_23 = arith.constant 8 : i32
    %78 = arith.muli %c2_i32, %c8_i32_23 : i32
    %79 = tpu.assume_multiple %78, 8 : i32
    %80 = arith.index_cast %79 : i32 to index
    %c0_24 = arith.constant 0 : index
    %81 = vector.load %arg6[%80, %c0_24] : memref<64x192xf32, #tpu.memory_space<vmem>>, vector<8x192xf32>
    %cst_25 = arith.constant dense<0.000000e+00> : vector<8x192xf32>
    %82 = tpu.matmul %76, %7, %cst_25 {dimension_numbers = #tpu.dot_dimension_numbers<[1], [0], [0], [1], [0, 0, 1, 1], [], []>} : vector<8x64xf32>, vector<64x192xf32>, vector<8x192xf32> -> vector<8x192xf32>
    %83 = vector.extract_strided_slice %81 {offsets = [0, 0], sizes = [8, 64], strides = [1, 1]} : vector<8x192xf32> to vector<8x64xf32>
    %84 = vector.extract_strided_slice %82 {offsets = [0, 0], sizes = [8, 64], strides = [1, 1]} : vector<8x192xf32> to vector<8x64xf32>
    %85 = arith.addf %83, %84 : vector<8x64xf32>
    %86 = arith.negf %85 : vector<8x64xf32>
    %87 = math.exp %86 : vector<8x64xf32>
    %cst_26 = arith.constant 1.000000e+00 : f32
    %88 = vector.broadcast %cst_26 : f32 to vector<8x64xf32>
    %89 = arith.addf %88, %87 : vector<8x64xf32>
    %90 = arith.divf %88, %89 : vector<8x64xf32>
    %91 = vector.extract_strided_slice %81 {offsets = [0, 64], sizes = [8, 64], strides = [1, 1]} : vector<8x192xf32> to vector<8x64xf32>
    %92 = vector.extract_strided_slice %82 {offsets = [0, 64], sizes = [8, 64], strides = [1, 1]} : vector<8x192xf32> to vector<8x64xf32>
    %93 = arith.addf %91, %92 : vector<8x64xf32>
    %94 = arith.negf %93 : vector<8x64xf32>
    %95 = math.exp %94 : vector<8x64xf32>
    %cst_27 = arith.constant 1.000000e+00 : f32
    %96 = vector.broadcast %cst_27 : f32 to vector<8x64xf32>
    %97 = arith.addf %96, %95 : vector<8x64xf32>
    %98 = arith.divf %96, %97 : vector<8x64xf32>
    %99 = vector.extract_strided_slice %81 {offsets = [0, 128], sizes = [8, 64], strides = [1, 1]} : vector<8x192xf32> to vector<8x64xf32>
    %100 = vector.extract_strided_slice %82 {offsets = [0, 128], sizes = [8, 64], strides = [1, 1]} : vector<8x192xf32> to vector<8x64xf32>
    %101 = arith.addf %100, %10 : vector<8x64xf32>
    %102 = arith.mulf %90, %101 : vector<8x64xf32>
    %103 = arith.addf %99, %102 : vector<8x64xf32>
    %104 = math.tanh %103 : vector<8x64xf32>
    %cst_28 = arith.constant 1.000000e+00 : f32
    %105 = vector.broadcast %cst_28 : f32 to vector<8x64xf32>
    %106 = arith.subf %105, %98 : vector<8x64xf32>
    %107 = arith.mulf %106, %104 : vector<8x64xf32>
    %108 = arith.mulf %98, %76 : vector<8x64xf32>
    %109 = arith.addf %107, %108 : vector<8x64xf32>
    %110 = arith.addf %77, %109 : vector<8x64xf32>
    %c3_i32 = arith.constant 3 : i32
    %c8_i32_29 = arith.constant 8 : i32
    %111 = arith.muli %c3_i32, %c8_i32_29 : i32
    %112 = tpu.assume_multiple %111, 8 : i32
    %113 = arith.index_cast %112 : i32 to index
    %c0_30 = arith.constant 0 : index
    %114 = vector.load %arg6[%113, %c0_30] : memref<64x192xf32, #tpu.memory_space<vmem>>, vector<8x192xf32>
    %cst_31 = arith.constant dense<0.000000e+00> : vector<8x192xf32>
    %115 = tpu.matmul %109, %7, %cst_31 {dimension_numbers = #tpu.dot_dimension_numbers<[1], [0], [0], [1], [0, 0, 1, 1], [], []>} : vector<8x64xf32>, vector<64x192xf32>, vector<8x192xf32> -> vector<8x192xf32>
    %116 = vector.extract_strided_slice %114 {offsets = [0, 0], sizes = [8, 64], strides = [1, 1]} : vector<8x192xf32> to vector<8x64xf32>
    %117 = vector.extract_strided_slice %115 {offsets = [0, 0], sizes = [8, 64], strides = [1, 1]} : vector<8x192xf32> to vector<8x64xf32>
    %118 = arith.addf %116, %117 : vector<8x64xf32>
    %119 = arith.negf %118 : vector<8x64xf32>
    %120 = math.exp %119 : vector<8x64xf32>
    %cst_32 = arith.constant 1.000000e+00 : f32
    %121 = vector.broadcast %cst_32 : f32 to vector<8x64xf32>
    %122 = arith.addf %121, %120 : vector<8x64xf32>
    %123 = arith.divf %121, %122 : vector<8x64xf32>
    %124 = vector.extract_strided_slice %114 {offsets = [0, 64], sizes = [8, 64], strides = [1, 1]} : vector<8x192xf32> to vector<8x64xf32>
    %125 = vector.extract_strided_slice %115 {offsets = [0, 64], sizes = [8, 64], strides = [1, 1]} : vector<8x192xf32> to vector<8x64xf32>
    %126 = arith.addf %124, %125 : vector<8x64xf32>
    %127 = arith.negf %126 : vector<8x64xf32>
    %128 = math.exp %127 : vector<8x64xf32>
    %cst_33 = arith.constant 1.000000e+00 : f32
    %129 = vector.broadcast %cst_33 : f32 to vector<8x64xf32>
    %130 = arith.addf %129, %128 : vector<8x64xf32>
    %131 = arith.divf %129, %130 : vector<8x64xf32>
    %132 = vector.extract_strided_slice %114 {offsets = [0, 128], sizes = [8, 64], strides = [1, 1]} : vector<8x192xf32> to vector<8x64xf32>
    %133 = vector.extract_strided_slice %115 {offsets = [0, 128], sizes = [8, 64], strides = [1, 1]} : vector<8x192xf32> to vector<8x64xf32>
    %134 = arith.addf %133, %10 : vector<8x64xf32>
    %135 = arith.mulf %123, %134 : vector<8x64xf32>
    %136 = arith.addf %132, %135 : vector<8x64xf32>
    %137 = math.tanh %136 : vector<8x64xf32>
    %cst_34 = arith.constant 1.000000e+00 : f32
    %138 = vector.broadcast %cst_34 : f32 to vector<8x64xf32>
    %139 = arith.subf %138, %131 : vector<8x64xf32>
    %140 = arith.mulf %139, %137 : vector<8x64xf32>
    %141 = arith.mulf %131, %109 : vector<8x64xf32>
    %142 = arith.addf %140, %141 : vector<8x64xf32>
    %143 = arith.addf %110, %142 : vector<8x64xf32>
    %c4_i32 = arith.constant 4 : i32
    %c8_i32_35 = arith.constant 8 : i32
    %144 = arith.muli %c4_i32, %c8_i32_35 : i32
    %145 = tpu.assume_multiple %144, 8 : i32
    %146 = arith.index_cast %145 : i32 to index
    %c0_36 = arith.constant 0 : index
    %147 = vector.load %arg6[%146, %c0_36] : memref<64x192xf32, #tpu.memory_space<vmem>>, vector<8x192xf32>
    %cst_37 = arith.constant dense<0.000000e+00> : vector<8x192xf32>
    %148 = tpu.matmul %142, %7, %cst_37 {dimension_numbers = #tpu.dot_dimension_numbers<[1], [0], [0], [1], [0, 0, 1, 1], [], []>} : vector<8x64xf32>, vector<64x192xf32>, vector<8x192xf32> -> vector<8x192xf32>
    %149 = vector.extract_strided_slice %147 {offsets = [0, 0], sizes = [8, 64], strides = [1, 1]} : vector<8x192xf32> to vector<8x64xf32>
    %150 = vector.extract_strided_slice %148 {offsets = [0, 0], sizes = [8, 64], strides = [1, 1]} : vector<8x192xf32> to vector<8x64xf32>
    %151 = arith.addf %149, %150 : vector<8x64xf32>
    %152 = arith.negf %151 : vector<8x64xf32>
    %153 = math.exp %152 : vector<8x64xf32>
    %cst_38 = arith.constant 1.000000e+00 : f32
    %154 = vector.broadcast %cst_38 : f32 to vector<8x64xf32>
    %155 = arith.addf %154, %153 : vector<8x64xf32>
    %156 = arith.divf %154, %155 : vector<8x64xf32>
    %157 = vector.extract_strided_slice %147 {offsets = [0, 64], sizes = [8, 64], strides = [1, 1]} : vector<8x192xf32> to vector<8x64xf32>
    %158 = vector.extract_strided_slice %148 {offsets = [0, 64], sizes = [8, 64], strides = [1, 1]} : vector<8x192xf32> to vector<8x64xf32>
    %159 = arith.addf %157, %158 : vector<8x64xf32>
    %160 = arith.negf %159 : vector<8x64xf32>
    %161 = math.exp %160 : vector<8x64xf32>
    %cst_39 = arith.constant 1.000000e+00 : f32
    %162 = vector.broadcast %cst_39 : f32 to vector<8x64xf32>
    %163 = arith.addf %162, %161 : vector<8x64xf32>
    %164 = arith.divf %162, %163 : vector<8x64xf32>
    %165 = vector.extract_strided_slice %147 {offsets = [0, 128], sizes = [8, 64], strides = [1, 1]} : vector<8x192xf32> to vector<8x64xf32>
    %166 = vector.extract_strided_slice %148 {offsets = [0, 128], sizes = [8, 64], strides = [1, 1]} : vector<8x192xf32> to vector<8x64xf32>
    %167 = arith.addf %166, %10 : vector<8x64xf32>
    %168 = arith.mulf %156, %167 : vector<8x64xf32>
    %169 = arith.addf %165, %168 : vector<8x64xf32>
    %170 = math.tanh %169 : vector<8x64xf32>
    %cst_40 = arith.constant 1.000000e+00 : f32
    %171 = vector.broadcast %cst_40 : f32 to vector<8x64xf32>
    %172 = arith.subf %171, %164 : vector<8x64xf32>
    %173 = arith.mulf %172, %170 : vector<8x64xf32>
    %174 = arith.mulf %164, %142 : vector<8x64xf32>
    %175 = arith.addf %173, %174 : vector<8x64xf32>
    %176 = arith.addf %143, %175 : vector<8x64xf32>
    %c5_i32 = arith.constant 5 : i32
    %c8_i32_41 = arith.constant 8 : i32
    %177 = arith.muli %c5_i32, %c8_i32_41 : i32
    %178 = tpu.assume_multiple %177, 8 : i32
    %179 = arith.index_cast %178 : i32 to index
    %c0_42 = arith.constant 0 : index
    %180 = vector.load %arg6[%179, %c0_42] : memref<64x192xf32, #tpu.memory_space<vmem>>, vector<8x192xf32>
    %cst_43 = arith.constant dense<0.000000e+00> : vector<8x192xf32>
    %181 = tpu.matmul %175, %7, %cst_43 {dimension_numbers = #tpu.dot_dimension_numbers<[1], [0], [0], [1], [0, 0, 1, 1], [], []>} : vector<8x64xf32>, vector<64x192xf32>, vector<8x192xf32> -> vector<8x192xf32>
    %182 = vector.extract_strided_slice %180 {offsets = [0, 0], sizes = [8, 64], strides = [1, 1]} : vector<8x192xf32> to vector<8x64xf32>
    %183 = vector.extract_strided_slice %181 {offsets = [0, 0], sizes = [8, 64], strides = [1, 1]} : vector<8x192xf32> to vector<8x64xf32>
    %184 = arith.addf %182, %183 : vector<8x64xf32>
    %185 = arith.negf %184 : vector<8x64xf32>
    %186 = math.exp %185 : vector<8x64xf32>
    %cst_44 = arith.constant 1.000000e+00 : f32
    %187 = vector.broadcast %cst_44 : f32 to vector<8x64xf32>
    %188 = arith.addf %187, %186 : vector<8x64xf32>
    %189 = arith.divf %187, %188 : vector<8x64xf32>
    %190 = vector.extract_strided_slice %180 {offsets = [0, 64], sizes = [8, 64], strides = [1, 1]} : vector<8x192xf32> to vector<8x64xf32>
    %191 = vector.extract_strided_slice %181 {offsets = [0, 64], sizes = [8, 64], strides = [1, 1]} : vector<8x192xf32> to vector<8x64xf32>
    %192 = arith.addf %190, %191 : vector<8x64xf32>
    %193 = arith.negf %192 : vector<8x64xf32>
    %194 = math.exp %193 : vector<8x64xf32>
    %cst_45 = arith.constant 1.000000e+00 : f32
    %195 = vector.broadcast %cst_45 : f32 to vector<8x64xf32>
    %196 = arith.addf %195, %194 : vector<8x64xf32>
    %197 = arith.divf %195, %196 : vector<8x64xf32>
    %198 = vector.extract_strided_slice %180 {offsets = [0, 128], sizes = [8, 64], strides = [1, 1]} : vector<8x192xf32> to vector<8x64xf32>
    %199 = vector.extract_strided_slice %181 {offsets = [0, 128], sizes = [8, 64], strides = [1, 1]} : vector<8x192xf32> to vector<8x64xf32>
    %200 = arith.addf %199, %10 : vector<8x64xf32>
    %201 = arith.mulf %189, %200 : vector<8x64xf32>
    %202 = arith.addf %198, %201 : vector<8x64xf32>
    %203 = math.tanh %202 : vector<8x64xf32>
    %cst_46 = arith.constant 1.000000e+00 : f32
    %204 = vector.broadcast %cst_46 : f32 to vector<8x64xf32>
    %205 = arith.subf %204, %197 : vector<8x64xf32>
    %206 = arith.mulf %205, %203 : vector<8x64xf32>
    %207 = arith.mulf %197, %175 : vector<8x64xf32>
    %208 = arith.addf %206, %207 : vector<8x64xf32>
    %209 = arith.addf %176, %208 : vector<8x64xf32>
    %c6_i32 = arith.constant 6 : i32
    %c8_i32_47 = arith.constant 8 : i32
    %210 = arith.muli %c6_i32, %c8_i32_47 : i32
    %211 = tpu.assume_multiple %210, 8 : i32
    %212 = arith.index_cast %211 : i32 to index
    %c0_48 = arith.constant 0 : index
    %213 = vector.load %arg6[%212, %c0_48] : memref<64x192xf32, #tpu.memory_space<vmem>>, vector<8x192xf32>
    %cst_49 = arith.constant dense<0.000000e+00> : vector<8x192xf32>
    %214 = tpu.matmul %208, %7, %cst_49 {dimension_numbers = #tpu.dot_dimension_numbers<[1], [0], [0], [1], [0, 0, 1, 1], [], []>} : vector<8x64xf32>, vector<64x192xf32>, vector<8x192xf32> -> vector<8x192xf32>
    %215 = vector.extract_strided_slice %213 {offsets = [0, 0], sizes = [8, 64], strides = [1, 1]} : vector<8x192xf32> to vector<8x64xf32>
    %216 = vector.extract_strided_slice %214 {offsets = [0, 0], sizes = [8, 64], strides = [1, 1]} : vector<8x192xf32> to vector<8x64xf32>
    %217 = arith.addf %215, %216 : vector<8x64xf32>
    %218 = arith.negf %217 : vector<8x64xf32>
    %219 = math.exp %218 : vector<8x64xf32>
    %cst_50 = arith.constant 1.000000e+00 : f32
    %220 = vector.broadcast %cst_50 : f32 to vector<8x64xf32>
    %221 = arith.addf %220, %219 : vector<8x64xf32>
    %222 = arith.divf %220, %221 : vector<8x64xf32>
    %223 = vector.extract_strided_slice %213 {offsets = [0, 64], sizes = [8, 64], strides = [1, 1]} : vector<8x192xf32> to vector<8x64xf32>
    %224 = vector.extract_strided_slice %214 {offsets = [0, 64], sizes = [8, 64], strides = [1, 1]} : vector<8x192xf32> to vector<8x64xf32>
    %225 = arith.addf %223, %224 : vector<8x64xf32>
    %226 = arith.negf %225 : vector<8x64xf32>
    %227 = math.exp %226 : vector<8x64xf32>
    %cst_51 = arith.constant 1.000000e+00 : f32
    %228 = vector.broadcast %cst_51 : f32 to vector<8x64xf32>
    %229 = arith.addf %228, %227 : vector<8x64xf32>
    %230 = arith.divf %228, %229 : vector<8x64xf32>
    %231 = vector.extract_strided_slice %213 {offsets = [0, 128], sizes = [8, 64], strides = [1, 1]} : vector<8x192xf32> to vector<8x64xf32>
    %232 = vector.extract_strided_slice %214 {offsets = [0, 128], sizes = [8, 64], strides = [1, 1]} : vector<8x192xf32> to vector<8x64xf32>
    %233 = arith.addf %232, %10 : vector<8x64xf32>
    %234 = arith.mulf %222, %233 : vector<8x64xf32>
    %235 = arith.addf %231, %234 : vector<8x64xf32>
    %236 = math.tanh %235 : vector<8x64xf32>
    %cst_52 = arith.constant 1.000000e+00 : f32
    %237 = vector.broadcast %cst_52 : f32 to vector<8x64xf32>
    %238 = arith.subf %237, %230 : vector<8x64xf32>
    %239 = arith.mulf %238, %236 : vector<8x64xf32>
    %240 = arith.mulf %230, %208 : vector<8x64xf32>
    %241 = arith.addf %239, %240 : vector<8x64xf32>
    %242 = arith.addf %209, %241 : vector<8x64xf32>
    %c7_i32 = arith.constant 7 : i32
    %c8_i32_53 = arith.constant 8 : i32
    %243 = arith.muli %c7_i32, %c8_i32_53 : i32
    %244 = tpu.assume_multiple %243, 8 : i32
    %245 = arith.index_cast %244 : i32 to index
    %c0_54 = arith.constant 0 : index
    %246 = vector.load %arg6[%245, %c0_54] : memref<64x192xf32, #tpu.memory_space<vmem>>, vector<8x192xf32>
    %cst_55 = arith.constant dense<0.000000e+00> : vector<8x192xf32>
    %247 = tpu.matmul %241, %7, %cst_55 {dimension_numbers = #tpu.dot_dimension_numbers<[1], [0], [0], [1], [0, 0, 1, 1], [], []>} : vector<8x64xf32>, vector<64x192xf32>, vector<8x192xf32> -> vector<8x192xf32>
    %248 = vector.extract_strided_slice %246 {offsets = [0, 0], sizes = [8, 64], strides = [1, 1]} : vector<8x192xf32> to vector<8x64xf32>
    %249 = vector.extract_strided_slice %247 {offsets = [0, 0], sizes = [8, 64], strides = [1, 1]} : vector<8x192xf32> to vector<8x64xf32>
    %250 = arith.addf %248, %249 : vector<8x64xf32>
    %251 = arith.negf %250 : vector<8x64xf32>
    %252 = math.exp %251 : vector<8x64xf32>
    %cst_56 = arith.constant 1.000000e+00 : f32
    %253 = vector.broadcast %cst_56 : f32 to vector<8x64xf32>
    %254 = arith.addf %253, %252 : vector<8x64xf32>
    %255 = arith.divf %253, %254 : vector<8x64xf32>
    %256 = vector.extract_strided_slice %246 {offsets = [0, 64], sizes = [8, 64], strides = [1, 1]} : vector<8x192xf32> to vector<8x64xf32>
    %257 = vector.extract_strided_slice %247 {offsets = [0, 64], sizes = [8, 64], strides = [1, 1]} : vector<8x192xf32> to vector<8x64xf32>
    %258 = arith.addf %256, %257 : vector<8x64xf32>
    %259 = arith.negf %258 : vector<8x64xf32>
    %260 = math.exp %259 : vector<8x64xf32>
    %cst_57 = arith.constant 1.000000e+00 : f32
    %261 = vector.broadcast %cst_57 : f32 to vector<8x64xf32>
    %262 = arith.addf %261, %260 : vector<8x64xf32>
    %263 = arith.divf %261, %262 : vector<8x64xf32>
    %264 = vector.extract_strided_slice %246 {offsets = [0, 128], sizes = [8, 64], strides = [1, 1]} : vector<8x192xf32> to vector<8x64xf32>
    %265 = vector.extract_strided_slice %247 {offsets = [0, 128], sizes = [8, 64], strides = [1, 1]} : vector<8x192xf32> to vector<8x64xf32>
    %266 = arith.addf %265, %10 : vector<8x64xf32>
    %267 = arith.mulf %255, %266 : vector<8x64xf32>
    %268 = arith.addf %264, %267 : vector<8x64xf32>
    %269 = math.tanh %268 : vector<8x64xf32>
    %cst_58 = arith.constant 1.000000e+00 : f32
    %270 = vector.broadcast %cst_58 : f32 to vector<8x64xf32>
    %271 = arith.subf %270, %263 : vector<8x64xf32>
    %272 = arith.mulf %271, %269 : vector<8x64xf32>
    %273 = arith.mulf %263, %241 : vector<8x64xf32>
    %274 = arith.addf %272, %273 : vector<8x64xf32>
    %275 = arith.addf %242, %274 : vector<8x64xf32>
    %c8_i32_59 = arith.constant 8 : i32
    %c0_60 = arith.constant 0 : index
    %c0_61 = arith.constant 0 : index
    %276 = vector.load %arg5[%c0_60, %c0_61] : memref<8x64xf32, #tpu.memory_space<vmem>>, vector<8x64xf32>
    tpu.vector_store %arg5[%c0_60, %c0_61], %275 {strides = array<i32>} : memref<8x64xf32, #tpu.memory_space<vmem>>, vector<8x64xf32>,
    return
  }
}

</mosaic_0001>

<llo_original>
// kernel: tpu_custom_call.1
$region0: #{tpu_custom_call.1}
  #allocation0 [shape = 'u32[]', space=smem, size = 0x4, offset = 0x4, fixed_abs, tag = 'smem constant byte address 0x4 - core index']
  #allocation1 [shape = 'u32[144,128]{1,0:T(1,128)}', space=vmem, size = 0x12000, scoped, tag = 'internal scratch']
  #allocation2 [shape = 'f32[64,192]{1,0:T(8,128)}', space=vmem, size = 0x10000, scoped, tag = 'scratch operand']
  %s0 = inlined_call_operand.vmem [shape: f32[64,32], index: 0, kind: input, shape index: {}]
  %s1 = inlined_call_operand.vmem [shape: f32[32,192], index: 1, kind: input, shape index: {}]
  %s2 = inlined_call_operand.vmem [shape: f32[1,192], index: 2, kind: input, shape index: {}]
  %s3 = inlined_call_operand.hbm [shape: f32[64,192], index: 3, kind: input, shape index: {}]
  %s4 = inlined_call_operand.vmem [shape: f32[1,64], index: 4, kind: input, shape index: {}]
  %s5 = inlined_call_operand.hbm [shape: f32[8,64], index: 5, kind: output, shape index: {}]
  %s6 = sld [smem:[#allocation0]]
  $region34: #{tpu_custom_call.1} parent=0
    _
  %s8 = ssub.s32 1, %s6
  %s9 = scalar_select 0, %s8, %s6
  $region1: #{tpu_custom_call.1} parent=0
    #allocation3 [shape = 'u8[65536]{0}', space=vmem, size = 0x10000, scoped, tag = 'input window, operand 3, single buffered']
    #allocation4 [shape = 's32[1]{0}', space=sflag, size = 0x4, scoped, tag = 'scoped memory for tpu_custom_call.1']
    #allocation5 [shape = 's32[1]{0}', space=sflag, size = 0x4, scoped, tag = 'scoped memory for tpu_custom_call.1']
    #allocation6 [shape = 'u8[4096]{0}', space=vmem, size = 0x1000, scoped, tag = 'output window, operand 0, single buffered']
    %10 = vsyncpa [#allocation4], 0
    %11 = vsyncpa [#allocation5], 0
    // Predicated region
    $region2: #{tpu_custom_call.1} parent=1 // pred_check
      _
    $region3: #{tpu_custom_call.1} parent=1 // pred_check_branch
      %13 = sbr.rel (0) target = $region5
    $region4: #{tpu_custom_call.1} parent=1 // pred_region
      _
    $region5: #{tpu_custom_call.1} parent=1 // pred_fallthru
      _
    // Predicated region
    $region6: #{tpu_custom_call.1} parent=1 // pred_check
      _
    $region7: #{tpu_custom_call.1} parent=1 // pred_check_branch
      %15 = sbr.rel (0) target = $region9
    $region8: #{tpu_custom_call.1} parent=1 // pred_region
      _
    $region9: #{tpu_custom_call.1} parent=1 // pred_fallthru
      _
    // Predicated region
    $region10: #{tpu_custom_call.1} parent=1 // pred_check
      _
    $region11: #{tpu_custom_call.1} parent=1 // pred_check_branch
      %17 = sbr.rel (0) target = $region13
    $region12: #{tpu_custom_call.1} parent=1 // pred_region
      _
    $region13: #{tpu_custom_call.1} parent=1 // pred_fallthru
      _
    // Predicated region
    $region14: #{tpu_custom_call.1} parent=1 // pred_check
      _
    $region15: #{tpu_custom_call.1} parent=1 // pred_check_branch
      %19 = sbr.rel (0) target = $region17
    $region16: #{tpu_custom_call.1} parent=1 // pred_region
      %s21 = ssub.s32 2048, 2048
      %22 = vsyncadd [#allocation4], %s21
      %s23 = sshll.u32 [#allocation3], 4
      %s24 = int_to_ptr.vmem [resolvable:$true] %s23
      %29 = dma.hbm_to_vmem [thread:$0]  %s3, 2048, %s24, [#allocation4], 256, 256, 16
    $region17: #{tpu_custom_call.1} parent=1 // pred_fallthru
      _
    // Predicated region
    $region18: #{tpu_custom_call.1} parent=1 // pred_check
      _
    $region19: #{tpu_custom_call.1} parent=1 // pred_check_branch
      %31 = sbr.rel (0) target = $region21
    $region20: #{tpu_custom_call.1} parent=1 // pred_region
      _
    $region21: #{tpu_custom_call.1} parent=1 // pred_fallthru
      _
    // Predicated region
    $region22: #{tpu_custom_call.1} parent=1 // pred_check
      _
    $region23: #{tpu_custom_call.1} parent=1 // pred_check_branch
      %33 = sbr.rel (0) target = $region25
    $region24: #{tpu_custom_call.1} parent=1 // pred_region
      %34 = dma.done [#allocation4], 2048
    $region25: #{tpu_custom_call.1} parent=1 // pred_fallthru
      _
    %v35 = vld [vmem:[%s0] sm:$0xff]
    %v36 = vld [vmem:[%s0 + $0x8] sm:$0xff]
    %v37 = vld [vmem:[%s0 + $0x10] sm:$0xff]
    %v38 = vld [vmem:[%s0 + $0x18] sm:$0xff]
    %v39 = vld [vmem:[%s0 + $0x20] sm:$0xff]
    %v40 = vld [vmem:[%s0 + $0x28] sm:$0xff]
    %v41 = vld [vmem:[%s0 + $0x30] sm:$0xff]
    %v42 = vld [vmem:[%s0 + $0x38] sm:$0xff]
    %v43 = vld [vmem:[%s1] sm:$0xff]
    %v44 = vld [vmem:[%s1 + $0x8] sm:$0xff]
    %v45 = vld [vmem:[%s1 + $0x10] sm:$0xff]
    %v46 = vld [vmem:[%s1 + $0x18] sm:$0xff]
    %v47 = vld [vmem:[%s1 + $0x20] sm:$0xff]
    %v48 = vld [vmem:[%s1 + $0x28] sm:$0xff]
    %v49 = vld [vmem:[%s1 + $0x30] sm:$0xff]
    %v50 = vld [vmem:[%s1 + $0x38] sm:$0xff]
    %v51 = vld [vmem:[%s2] sm:$0x3]
    %v53 = vlaneseq
    %v54 = vshrl.u32 %v53, 7
    %v55 = vsub.s32 0, %v54
    %v56 = vrot.slane %v51, %v55
    %v57 = vlaneseq
    %v58 = vshrl.u32 %v57, 7
    %v59 = vsub.s32 1, %v58
    %v60 = vrot.slane %v51, %v59
    %vm63 = vcmask 261120
    %v65 = vsel %vm63, %v35, 0
    %v68 = vsel %vm63, %v36, 0
    %v71 = vsel %vm63, %v37, 0
    %v74 = vsel %vm63, %v38, 0
    %v77 = vsel %vm63, %v39, 0
    %v80 = vsel %vm63, %v40, 0
    %v83 = vsel %vm63, %v41, 0
    %v86 = vsel %vm63, %v42, 0
    %88 = vmatprep.subr.mxu0 %v44
    %89 = vmatpush1.msra.mxu0 %v43
    %90 = vmatprep.subr.mxu0 %v46
    %91 = vmatpush1.msra.mxu0 %v45
    %92 = vmatprep.subr.mxu0 %v48
    %93 = vmatpush1.msra.mxu0 %v47
    %94 = vmatprep.subr.mxu0 %v50
    %95 = vmatpush1.msra.mxu0 %v49
    %96 = vmatprep.subr.mxu0 0.0
    %97 = vmatpush1.msra.mxu0 0.0
    %98 = vmatprep.subr.mxu0 0.0
    %99 = vmatpush1.msra.mxu0 0.0
    %100 = vmatprep.subr.mxu0 0.0
    %101 = vmatpush1.msra.mxu0 0.0
    %102 = vmatprep.subr.mxu0 0.0
    %103 = vmatpush1.msra.mxu0 0.0
    %104 = vmatprep.subr.mxu0 0.0
    %105 = vmatpush1.msra.mxu0 0.0
    %106 = vmatprep.subr.mxu0 0.0
    %107 = vmatpush1.msra.mxu0 0.0
    %108 = vmatprep.subr.mxu0 0.0
    %109 = vmatpush1.msra.mxu0 0.0
    %110 = vmatprep.subr.mxu0 0.0
    %111 = vmatpush1.msra.mxu0 0.0
    %112 = vmatprep.subr.mxu0 0.0
    %113 = vmatpush1.msra.mxu0 0.0
    %114 = vmatprep.subr.mxu0 0.0
    %115 = vmatpush1.msra.mxu0 0.0
    %116 = vmatprep.subr.mxu0 0.0
    %117 = vmatpush1.msra.mxu0 0.0
    %118 = vmatprep.subr.mxu0 0.0
    %119 = vmatpush1.msra.mxu0 0.0
    %120 = vmatprep.subr.mxu0 0.0
    %121 = vmatpush1.msra.mxu0 0.0
    %122 = vmatprep.subr.mxu0 0.0
    %123 = vmatpush1.msra.mxu0 0.0
    %124 = vmatprep.subr.mxu0 0.0
    %125 = vmatpush1.msra.mxu0 0.0
    %126 = vmatprep.subr.mxu0 0.0
    %127 = vmatpush1.msra.mxu0 0.0
    %128 = vmatprep.subr.mxu0 0.0
    %129 = vmatpush1.msra.mxu0 0.0
    %130 = vmatprep.subr.mxu0 0.0
    %131 = vmatpush1.msra.mxu0 0.0
    %132 = vmatprep.subr.mxu0 0.0
    %133 = vmatpush1.msra.mxu0 0.0
    %134 = vmatprep.subr.mxu0 0.0
    %135 = vmatpush1.msra.mxu0 0.0
    %136 = vmatprep.subr.mxu0 0.0
    %137 = vmatpush1.msra.mxu0 0.0
    %138 = vmatprep.subr.mxu0 0.0
    %139 = vmatpush1.msra.mxu0 0.0
    %140 = vmatprep.subr.mxu0 0.0
    %141 = vmatpush1.msra.mxu0 0.0
    %142 = vmatprep.subr.mxu0 0.0
    %143 = vmatpush1.msra.mxu0 0.0
    %144 = vmatprep.subr.mxu0 0.0
    %145 = vmatpush1.msra.mxu0 0.0
    %146 = vmatprep.subr.mxu0 0.0
    %147 = vmatpush1.msra.mxu0 0.0
    %148 = vmatprep.subr.mxu0 0.0
    %149 = vmatpush1.msra.mxu0 0.0
    %150 = vmatprep.subr.mxu0 0.0
    %151 = vmatpush1.msra.mxu0 0.0
    %152 = vmatprep.mubr.f32.mxu0 0.0
    %153 = vmatmul.mubr.f32.gmra.mrb[0].mxu0 %v65
    %v154 = vpop.f32.mrb[0].mxu0
    %v155 = vadd.f32 %v56, %v154
    %v156 = vpop.f32.mrb[0].mxu0
    %v157 = vadd.f32 %v60, %v156
    %158 = vmatprep.mubr.f32.mxu0 0.0
    %159 = vmatmul.mubr.f32.gmra.mrb[0].mxu0 %v68
    %v160 = vpop.f32.mrb[0].mxu0
    %v161 = vadd.f32 %v56, %v160
    %v162 = vpop.f32.mrb[0].mxu0
    %v163 = vadd.f32 %v60, %v162
    %164 = vmatprep.mubr.f32.mxu0 0.0
    %165 = vmatmul.mubr.f32.gmra.mrb[0].mxu0 %v71
    %v166 = vpop.f32.mrb[0].mxu0
    %v167 = vadd.f32 %v56, %v166
    %v168 = vpop.f32.mrb[0].mxu0
    %v169 = vadd.f32 %v60, %v168
    %170 = vmatprep.mubr.f32.mxu0 0.0
    %171 = vmatmul.mubr.f32.gmra.mrb[0].mxu0 %v74
    %v172 = vpop.f32.mrb[0].mxu0
    %v173 = vadd.f32 %v56, %v172
    %v174 = vpop.f32.mrb[0].mxu0
    %v175 = vadd.f32 %v60, %v174
    %176 = vmatprep.mubr.f32.mxu0 0.0
    %177 = vmatmul.mubr.f32.gmra.mrb[0].mxu0 %v77
    %v178 = vpop.f32.mrb[0].mxu0
    %v179 = vadd.f32 %v56, %v178
    %v180 = vpop.f32.mrb[0].mxu0
    %v181 = vadd.f32 %v60, %v180
    %182 = vmatprep.mubr.f32.mxu0 0.0
    %183 = vmatmul.mubr.f32.gmra.mrb[0].mxu0 %v80
    %v184 = vpop.f32.mrb[0].mxu0
    %v185 = vadd.f32 %v56, %v184
    %v186 = vpop.f32.mrb[0].mxu0
    %v187 = vadd.f32 %v60, %v186
    %188 = vmatprep.mubr.f32.mxu0 0.0
    %189 = vmatmul.mubr.f32.gmra.mrb[0].mxu0 %v83
    %v190 = vpop.f32.mrb[0].mxu0
    %v191 = vadd.f32 %v56, %v190
    %v192 = vpop.f32.mrb[0].mxu0
    %v193 = vadd.f32 %v60, %v192
    %194 = vmatprep.mubr.f32.mxu0 0.0
    %195 = vmatmul.mubr.f32.gmra.mrb[0].mxu0 %v86
    %v196 = vpop.f32.mrb[0].mxu0
    %v197 = vadd.f32 %v56, %v196
    %v198 = vpop.f32.mrb[0].mxu0
    %v199 = vadd.f32 %v60, %v198
    %200 = vdwg.mxu0
    %201 = vst [vmem:[#allocation2] sm:$0xff] %v155
    %vm202 = vcmask 523264
    %203 = vst.msk [vmem:[#allocation2 + $0x8] sm:$0xff] %vm202, %v157
    %204 = vst [vmem:[#allocation2 + $0x10] sm:$0xff] %v161
    %205 = vst.msk [vmem:[#allocation2 + $0x18] sm:$0xff] %vm202, %v163
    %206 = vst [vmem:[#allocation2 + $0x20] sm:$0xff] %v167
    %207 = vst.msk [vmem:[#allocation2 + $0x28] sm:$0xff] %vm202, %v169
    %208 = vst [vmem:[#allocation2 + $0x30] sm:$0xff] %v173
    %209 = vst.msk [vmem:[#allocation2 + $0x38] sm:$0xff] %vm202, %v175
    %210 = vst [vmem:[#allocation2 + $0x40] sm:$0xff] %v179
    %211 = vst.msk [vmem:[#allocation2 + $0x48] sm:$0xff] %vm202, %v181
    %212 = vst [vmem:[#allocation2 + $0x50] sm:$0xff] %v185
    %213 = vst.msk [vmem:[#allocation2 + $0x58] sm:$0xff] %vm202, %v187
    %214 = vst [vmem:[#allocation2 + $0x60] sm:$0xff] %v191
    %215 = vst.msk [vmem:[#allocation2 + $0x68] sm:$0xff] %vm202, %v193
    %216 = vst [vmem:[#allocation2 + $0x70] sm:$0xff] %v197
    %217 = vst.msk [vmem:[#allocation2 + $0x78] sm:$0xff] %vm202, %v199
    %v218 = vld [vmem:[#allocation3] sm:$0xff]
    %v219 = vld [vmem:[#allocation3 + $0x8] sm:$0xff]
    %v220 = vld [vmem:[#allocation3 + $0x10] sm:$0xff]
    %v221 = vld [vmem:[#allocation3 + $0x18] sm:$0xff]
    %v222 = vld [vmem:[#allocation3 + $0x20] sm:$0xff]
    %v223 = vld [vmem:[#allocation3 + $0x28] sm:$0xff]
    %v224 = vld [vmem:[#allocation3 + $0x30] sm:$0xff]
    %v225 = vld [vmem:[#allocation3 + $0x38] sm:$0xff]
    %v226 = vld [vmem:[#allocation3 + $0x40] sm:$0xff]
    %v227 = vld [vmem:[#allocation3 + $0x48] sm:$0xff]
    %v228 = vld [vmem:[#allocation3 + $0x50] sm:$0xff]
    %v229 = vld [vmem:[#allocation3 + $0x58] sm:$0xff]
    %v230 = vld [vmem:[#allocation3 + $0x60] sm:$0xff]
    %v231 = vld [vmem:[#allocation3 + $0x68] sm:$0xff]
    %v232 = vld [vmem:[#allocation3 + $0x70] sm:$0xff]
    %v233 = vld [vmem:[#allocation3 + $0x78] sm:$0xff]
    %v234 = vld [vmem:[%s4] sm:$0x1]
    %v236 = vlaneseq
    %v237 = vshrl.u32 %v236, 7
    %v238 = vsub.s32 0, %v237
    %v239 = vrot.slane %v234, %v238
    %s241 = smul.u32 0, 2
    %s242 = smul.addr %s241, 8
    %s243 = scalar_lea.vmem [#allocation2], %s242
    %v244 = vld [vmem:[%s243] sm:$0xff]
    %v245 = vld [vmem:[%s243 + $0x8] sm:$0xff]
    %v247 = vsel %vm202, 0.0, 0
    %249 = vmatprep.subr.mxu0 %v219
    %250 = vmatpush1.msra.mxu0 %v218
    %251 = vmatprep.subr.mxu0 %v221
    %252 = vmatpush1.msra.mxu0 %v220
    %253 = vmatprep.subr.mxu0 %v223
    %254 = vmatpush1.msra.mxu0 %v222
    %255 = vmatprep.subr.mxu0 %v225
    %256 = vmatpush1.msra.mxu0 %v224
    %257 = vmatprep.subr.mxu0 %v227
    %258 = vmatpush1.msra.mxu0 %v226
    %259 = vmatprep.subr.mxu0 %v229
    %260 = vmatpush1.msra.mxu0 %v228
    %261 = vmatprep.subr.mxu0 %v231
    %262 = vmatpush1.msra.mxu0 %v230
    %263 = vmatprep.subr.mxu0 %v233
    %264 = vmatpush1.msra.mxu0 %v232
    %265 = vmatprep.subr.mxu0 0.0
    %266 = vmatpush1.msra.mxu0 0.0
    %267 = vmatprep.subr.mxu0 0.0
    %268 = vmatpush1.msra.mxu0 0.0
    %269 = vmatprep.subr.mxu0 0.0
    %270 = vmatpush1.msra.mxu0 0.0
    %271 = vmatprep.subr.mxu0 0.0
    %272 = vmatpush1.msra.mxu0 0.0
    %273 = vmatprep.subr.mxu0 0.0
    %274 = vmatpush1.msra.mxu0 0.0
    %275 = vmatprep.subr.mxu0 0.0
    %276 = vmatpush1.msra.mxu0 0.0
    %277 = vmatprep.subr.mxu0 0.0
    %278 = vmatpush1.msra.mxu0 0.0
    %279 = vmatprep.subr.mxu0 0.0
    %280 = vmatpush1.msra.mxu0 0.0
    %281 = vmatprep.subr.mxu0 0.0
    %282 = vmatpush1.msra.mxu0 0.0
    %283 = vmatprep.subr.mxu0 0.0
    %284 = vmatpush1.msra.mxu0 0.0
    %285 = vmatprep.subr.mxu0 0.0
    %286 = vmatpush1.msra.mxu0 0.0
    %287 = vmatprep.subr.mxu0 0.0
    %288 = vmatpush1.msra.mxu0 0.0
    %289 = vmatprep.subr.mxu0 0.0
    %290 = vmatpush1.msra.mxu0 0.0
    %291 = vmatprep.subr.mxu0 0.0
    %292 = vmatpush1.msra.mxu0 0.0
    %293 = vmatprep.subr.mxu0 0.0
    %294 = vmatpush1.msra.mxu0 0.0
    %295 = vmatprep.subr.mxu0 0.0
    %296 = vmatpush1.msra.mxu0 0.0
    %297 = vmatprep.subr.mxu0 0.0
    %298 = vmatpush1.msra.mxu0 0.0
    %299 = vmatprep.subr.mxu0 0.0
    %300 = vmatpush1.msra.mxu0 0.0
    %301 = vmatprep.subr.mxu0 0.0
    %302 = vmatpush1.msra.mxu0 0.0
    %303 = vmatprep.subr.mxu0 0.0
    %304 = vmatpush1.msra.mxu0 0.0
    %305 = vmatprep.subr.mxu0 0.0
    %306 = vmatpush1.msra.mxu0 0.0
    %307 = vmatprep.subr.mxu0 0.0
    %308 = vmatpush1.msra.mxu0 0.0
    %309 = vmatprep.subr.mxu0 0.0
    %310 = vmatpush1.msra.mxu0 0.0
    %311 = vmatprep.subr.mxu0 0.0
    %312 = vmatpush1.msra.mxu0 0.0
    %313 = vmatprep.mubr.f32.mxu0 0.0
    %314 = vmatmul.mubr.f32.gmra.mrb[0].mxu0 %v247
    %v315 = vpop.f32.mrb[0].mxu0
    %v316 = vadd.f32 0.0, %v315
    %v317 = vpop.f32.mrb[0].mxu0
    %v318 = vadd.f32 0.0, %v317
    %319 = vdwg.mxu0
    %v320 = vadd.f32 %v244, %v316
    %v321 = vxor.u32 %v320, 2147483648
    %v322 = vmul.f32 %v321, 1.442695
    %v323 = vpow.pop %v322
    %v324 = vadd.f32 %v323, 1.0
    %v325 = vrcp.pop %v324
    %v326 = vmul.f32 1.0, %v325
    %v327 = vadd.f32 %v318, %v239
    %v328 = vmul.f32 %v326, %v327
    %v329 = vadd.f32 %v245, %v328
    %v330 = vtanh.pop %v329
    %v331 = vsub.f32 1.0, %v326
    %333 = vrot.lane.b32.xlu0 %v330, 64
    %v334 = vpop.permute.xlu0 %333
    %v336 = vmul.f32 %v331, %v334
    %v337 = vmul.f32 %v326, 0.0
    %v338 = vadd.f32 %v336, %v337
    %v339 = vadd.f32 %v338, 0.0
    %s340 = smul.u32 1, 2
    %s341 = smul.addr %s340, 8
    %s342 = scalar_lea.vmem [#allocation2], %s341
    %v343 = vld [vmem:[%s342] sm:$0xff]
    %v344 = vld [vmem:[%s342 + $0x8] sm:$0xff]
    %346 = vrot.lane.b32.xlu0 %v338, 64
    %v347 = vpop.permute.xlu0 %346
    %v348 = vsel %vm202, %v347, 0
    %350 = vmatprep.subr.mxu0 %v219
    %351 = vmatpush1.msra.mxu0 %v218
    %352 = vmatprep.subr.mxu0 %v221
    %353 = vmatpush1.msra.mxu0 %v220
    %354 = vmatprep.subr.mxu0 %v223
    %355 = vmatpush1.msra.mxu0 %v222
    %356 = vmatprep.subr.mxu0 %v225
    %357 = vmatpush1.msra.mxu0 %v224
    %358 = vmatprep.subr.mxu0 %v227
    %359 = vmatpush1.msra.mxu0 %v226
    %360 = vmatprep.subr.mxu0 %v229
    %361 = vmatpush1.msra.mxu0 %v228
    %362 = vmatprep.subr.mxu0 %v231
    %363 = vmatpush1.msra.mxu0 %v230
    %364 = vmatprep.subr.mxu0 %v233
    %365 = vmatpush1.msra.mxu0 %v232
    %366 = vmatprep.subr.mxu0 0.0
    %367 = vmatpush1.msra.mxu0 0.0
    %368 = vmatprep.subr.mxu0 0.0
    %369 = vmatpush1.msra.mxu0 0.0
    %370 = vmatprep.subr.mxu0 0.0
    %371 = vmatpush1.msra.mxu0 0.0
    %372 = vmatprep.subr.mxu0 0.0
    %373 = vmatpush1.msra.mxu0 0.0
    %374 = vmatprep.subr.mxu0 0.0
    %375 = vmatpush1.msra.mxu0 0.0
    %376 = vmatprep.subr.mxu0 0.0
    %377 = vmatpush1.msra.mxu0 0.0
    %378 = vmatprep.subr.mxu0 0.0
    %379 = vmatpush1.msra.mxu0 0.0
    %380 = vmatprep.subr.mxu0 0.0
    %381 = vmatpush1.msra.mxu0 0.0
    %382 = vmatprep.subr.mxu0 0.0
    %383 = vmatpush1.msra.mxu0 0.0
    %384 = vmatprep.subr.mxu0 0.0
    %385 = vmatpush1.msra.mxu0 0.0
    %386 = vmatprep.subr.mxu0 0.0
    %387 = vmatpush1.msra.mxu0 0.0
    %388 = vmatprep.subr.mxu0 0.0
    %389 = vmatpush1.msra.mxu0 0.0
    %390 = vmatprep.subr.mxu0 0.0
    %391 = vmatpush1.msra.mxu0 0.0
    %392 = vmatprep.subr.mxu0 0.0
    %393 = vmatpush1.msra.mxu0 0.0
    %394 = vmatprep.subr.mxu0 0.0
    %395 = vmatpush1.msra.mxu0 0.0
    %396 = vmatprep.subr.mxu0 0.0
    %397 = vmatpush1.msra.mxu0 0.0
    %398 = vmatprep.subr.mxu0 0.0
    %399 = vmatpush1.msra.mxu0 0.0
    %400 = vmatprep.subr.mxu0 0.0
    %401 = vmatpush1.msra.mxu0 0.0
    %402 = vmatprep.subr.mxu0 0.0
    %403 = vmatpush1.msra.mxu0 0.0
    %404 = vmatprep.subr.mxu0 0.0
    %405 = vmatpush1.msra.mxu0 0.0
    %406 = vmatprep.subr.mxu0 0.0
    %407 = vmatpush1.msra.mxu0 0.0
    %408 = vmatprep.subr.mxu0 0.0
    %409 = vmatpush1.msra.mxu0 0.0
    %410 = vmatprep.subr.mxu0 0.0
    %411 = vmatpush1.msra.mxu0 0.0
    %412 = vmatprep.subr.mxu0 0.0
    %413 = vmatpush1.msra.mxu0 0.0
    %414 = vmatprep.mubr.f32.mxu0 0.0
    %415 = vmatmul.mubr.f32.gmra.mrb[0].mxu0 %v348
    %v416 = vpop.f32.mrb[0].mxu0
    %v417 = vadd.f32 0.0, %v416
    %v418 = vpop.f32.mrb[0].mxu0
    %v419 = vadd.f32 0.0, %v418
    %420 = vdwg.mxu0
    %v421 = vadd.f32 %v343, %v417
    %v422 = vxor.u32 %v421, 2147483648
    %v423 = vmul.f32 %v422, 1.442695
    %v424 = vpow.pop %v423
    %v425 = vadd.f32 %v424, 1.0
    %v426 = vrcp.pop %v425
    %v427 = vmul.f32 1.0, %v426
    %v428 = vadd.f32 %v419, %v239
    %v429 = vmul.f32 %v427, %v428
    %v430 = vadd.f32 %v344, %v429
    %v431 = vtanh.pop %v430
    %v432 = vsub.f32 1.0, %v427
    %434 = vrot.lane.b32.xlu0 %v431, 64
    %v435 = vpop.permute.xlu0 %434
    %v437 = vmul.f32 %v432, %v435
    %v438 = vmul.f32 %v427, %v338
    %v439 = vadd.f32 %v437, %v438
    %v440 = vadd.f32 %v339, %v439
    %s441 = smul.u32 2, 2
    %s442 = smul.addr %s441, 8
    %s443 = scalar_lea.vmem [#allocation2], %s442
    %v444 = vld [vmem:[%s443] sm:$0xff]
    %v445 = vld [vmem:[%s443 + $0x8] sm:$0xff]
    %447 = vrot.lane.b32.xlu0 %v439, 64
    %v448 = vpop.permute.xlu0 %447
    %v449 = vsel %vm202, %v448, 0
    %451 = vmatprep.subr.mxu0 %v219
    %452 = vmatpush1.msra.mxu0 %v218
    %453 = vmatprep.subr.mxu0 %v221
    %454 = vmatpush1.msra.mxu0 %v220
    %455 = vmatprep.subr.mxu0 %v223
    %456 = vmatpush1.msra.mxu0 %v222
    %457 = vmatprep.subr.mxu0 %v225
    %458 = vmatpush1.msra.mxu0 %v224
    %459 = vmatprep.subr.mxu0 %v227
    %460 = vmatpush1.msra.mxu0 %v226
    %461 = vmatprep.subr.mxu0 %v229
    %462 = vmatpush1.msra.mxu0 %v228
    %463 = vmatprep.subr.mxu0 %v231
    %464 = vmatpush1.msra.mxu0 %v230
    %465 = vmatprep.subr.mxu0 %v233
    %466 = vmatpush1.msra.mxu0 %v232
    %467 = vmatprep.subr.mxu0 0.0
    %468 = vmatpush1.msra.mxu0 0.0
    %469 = vmatprep.subr.mxu0 0.0
    %470 = vmatpush1.msra.mxu0 0.0
    %471 = vmatprep.subr.mxu0 0.0
    %472 = vmatpush1.msra.mxu0 0.0
    %473 = vmatprep.subr.mxu0 0.0
    %474 = vmatpush1.msra.mxu0 0.0
    %475 = vmatprep.subr.mxu0 0.0
    %476 = vmatpush1.msra.mxu0 0.0
    %477 = vmatprep.subr.mxu0 0.0
    %478 = vmatpush1.msra.mxu0 0.0
    %479 = vmatprep.subr.mxu0 0.0
    %480 = vmatpush1.msra.mxu0 0.0
    %481 = vmatprep.subr.mxu0 0.0
    %482 = vmatpush1.msra.mxu0 0.0
    %483 = vmatprep.subr.mxu0 0.0
    %484 = vmatpush1.msra.mxu0 0.0
    %485 = vmatprep.subr.mxu0 0.0
    %486 = vmatpush1.msra.mxu0 0.0
    %487 = vmatprep.subr.mxu0 0.0
    %488 = vmatpush1.msra.mxu0 0.0
    %489 = vmatprep.subr.mxu0 0.0
    %490 = vmatpush1.msra.mxu0 0.0
    %491 = vmatprep.subr.mxu0 0.0
    %492 = vmatpush1.msra.mxu0 0.0
    %493 = vmatprep.subr.mxu0 0.0
    %494 = vmatpush1.msra.mxu0 0.0
    %495 = vmatprep.subr.mxu0 0.0
    %496 = vmatpush1.msra.mxu0 0.0
    %497 = vmatprep.subr.mxu0 0.0
    %498 = vmatpush1.msra.mxu0 0.0
    %499 = vmatprep.subr.mxu0 0.0
    %500 = vmatpush1.msra.mxu0 0.0
    %501 = vmatprep.subr.mxu0 0.0
    %502 = vmatpush1.msra.mxu0 0.0
    %503 = vmatprep.subr.mxu0 0.0
    %504 = vmatpush1.msra.mxu0 0.0
    %505 = vmatprep.subr.mxu0 0.0
    %506 = vmatpush1.msra.mxu0 0.0
    %507 = vmatprep.subr.mxu0 0.0
    %508 = vmatpush1.msra.mxu0 0.0
    %509 = vmatprep.subr.mxu0 0.0
    %510 = vmatpush1.msra.mxu0 0.0
    %511 = vmatprep.subr.mxu0 0.0
    %512 = vmatpush1.msra.mxu0 0.0
    %513 = vmatprep.subr.mxu0 0.0
    %514 = vmatpush1.msra.mxu0 0.0
    %515 = vmatprep.mubr.f32.mxu0 0.0
    %516 = vmatmul.mubr.f32.gmra.mrb[0].mxu0 %v449
    %v517 = vpop.f32.mrb[0].mxu0
    %v518 = vadd.f32 0.0, %v517
    %v519 = vpop.f32.mrb[0].mxu0
    %v520 = vadd.f32 0.0, %v519
    %521 = vdwg.mxu0
    %v522 = vadd.f32 %v444, %v518
    %v523 = vxor.u32 %v522, 2147483648
    %v524 = vmul.f32 %v523, 1.442695
    %v525 = vpow.pop %v524
    %v526 = vadd.f32 %v525, 1.0
    %v527 = vrcp.pop %v526
    %v528 = vmul.f32 1.0, %v527
    %v529 = vadd.f32 %v520, %v239
    %v530 = vmul.f32 %v528, %v529
    %v531 = vadd.f32 %v445, %v530
    %v532 = vtanh.pop %v531
    %v533 = vsub.f32 1.0, %v528
    %535 = vrot.lane.b32.xlu0 %v532, 64
    %v536 = vpop.permute.xlu0 %535
    %v538 = vmul.f32 %v533, %v536
    %v539 = vmul.f32 %v528, %v439
    %v540 = vadd.f32 %v538, %v539
    %v541 = vadd.f32 %v440, %v540
    %s542 = smul.u32 3, 2
    %s543 = smul.addr %s542, 8
    %s544 = scalar_lea.vmem [#allocation2], %s543
    %v545 = vld [vmem:[%s544] sm:$0xff]
    %v546 = vld [vmem:[%s544 + $0x8] sm:$0xff]
    %548 = vrot.lane.b32.xlu0 %v540, 64
    %v549 = vpop.permute.xlu0 %548
    %v550 = vsel %vm202, %v549, 0
    %552 = vmatprep.subr.mxu0 %v219
    %553 = vmatpush1.msra.mxu0 %v218
    %554 = vmatprep.subr.mxu0 %v221
    %555 = vmatpush1.msra.mxu0 %v220
    %556 = vmatprep.subr.mxu0 %v223
    %557 = vmatpush1.msra.mxu0 %v222
    %558 = vmatprep.subr.mxu0 %v225
    %559 = vmatpush1.msra.mxu0 %v224
    %560 = vmatprep.subr.mxu0 %v227
    %561 = vmatpush1.msra.mxu0 %v226
    %562 = vmatprep.subr.mxu0 %v229
    %563 = vmatpush1.msra.mxu0 %v228
    %564 = vmatprep.subr.mxu0 %v231
    %565 = vmatpush1.msra.mxu0 %v230
    %566 = vmatprep.subr.mxu0 %v233
    %567 = vmatpush1.msra.mxu0 %v232
    %568 = vmatprep.subr.mxu0 0.0
    %569 = vmatpush1.msra.mxu0 0.0
    %570 = vmatprep.subr.mxu0 0.0
    %571 = vmatpush1.msra.mxu0 0.0
    %572 = vmatprep.subr.mxu0 0.0
    %573 = vmatpush1.msra.mxu0 0.0
    %574 = vmatprep.subr.mxu0 0.0
    %575 = vmatpush1.msra.mxu0 0.0
    %576 = vmatprep.subr.mxu0 0.0
    %577 = vmatpush1.msra.mxu0 0.0
    %578 = vmatprep.subr.mxu0 0.0
    %579 = vmatpush1.msra.mxu0 0.0
    %580 = vmatprep.subr.mxu0 0.0
    %581 = vmatpush1.msra.mxu0 0.0
    %582 = vmatprep.subr.mxu0 0.0
    %583 = vmatpush1.msra.mxu0 0.0
    %584 = vmatprep.subr.mxu0 0.0
    %585 = vmatpush1.msra.mxu0 0.0
    %586 = vmatprep.subr.mxu0 0.0
    %587 = vmatpush1.msra.mxu0 0.0
    %588 = vmatprep.subr.mxu0 0.0
    %589 = vmatpush1.msra.mxu0 0.0
    %590 = vmatprep.subr.mxu0 0.0
    %591 = vmatpush1.msra.mxu0 0.0
    %592 = vmatprep.subr.mxu0 0.0
    %593 = vmatpush1.msra.mxu0 0.0
    %594 = vmatprep.subr.mxu0 0.0
    %595 = vmatpush1.msra.mxu0 0.0
    %596 = vmatprep.subr.mxu0 0.0
    %597 = vmatpush1.msra.mxu0 0.0
    %598 = vmatprep.subr.mxu0 0.0
    %599 = vmatpush1.msra.mxu0 0.0
    %600 = vmatprep.subr.mxu0 0.0
    %601 = vmatpush1.msra.mxu0 0.0
    %602 = vmatprep.subr.mxu0 0.0
    %603 = vmatpush1.msra.mxu0 0.0
    %604 = vmatprep.subr.mxu0 0.0
    %605 = vmatpush1.msra.mxu0 0.0
    %606 = vmatprep.subr.mxu0 0.0
    %607 = vmatpush1.msra.mxu0 0.0
    %608 = vmatprep.subr.mxu0 0.0
    %609 = vmatpush1.msra.mxu0 0.0
    %610 = vmatprep.subr.mxu0 0.0
    %611 = vmatpush1.msra.mxu0 0.0
    %612 = vmatprep.subr.mxu0 0.0
    %613 = vmatpush1.msra.mxu0 0.0
    %614 = vmatprep.subr.mxu0 0.0
    %615 = vmatpush1.msra.mxu0 0.0
    %616 = vmatprep.mubr.f32.mxu0 0.0
    %617 = vmatmul.mubr.f32.gmra.mrb[0].mxu0 %v550
    %v618 = vpop.f32.mrb[0].mxu0
    %v619 = vadd.f32 0.0, %v618
    %v620 = vpop.f32.mrb[0].mxu0
    %v621 = vadd.f32 0.0, %v620
    %622 = vdwg.mxu0
    %v623 = vadd.f32 %v545, %v619
    %v624 = vxor.u32 %v623, 2147483648
    %v625 = vmul.f32 %v624, 1.442695
    %v626 = vpow.pop %v625
    %v627 = vadd.f32 %v626, 1.0
    %v628 = vrcp.pop %v627
    %v629 = vmul.f32 1.0, %v628
    %v630 = vadd.f32 %v621, %v239
    %v631 = vmul.f32 %v629, %v630
    %v632 = vadd.f32 %v546, %v631
    %v633 = vtanh.pop %v632
    %v634 = vsub.f32 1.0, %v629
    %636 = vrot.lane.b32.xlu0 %v633, 64
    %v637 = vpop.permute.xlu0 %636
    %v639 = vmul.f32 %v634, %v637
    %v640 = vmul.f32 %v629, %v540
    %v641 = vadd.f32 %v639, %v640
    %v642 = vadd.f32 %v541, %v641
    %s643 = smul.u32 4, 2
    %s644 = smul.addr %s643, 8
    %s645 = scalar_lea.vmem [#allocation2], %s644
    %v646 = vld [vmem:[%s645] sm:$0xff]
    %v647 = vld [vmem:[%s645 + $0x8] sm:$0xff]
    %649 = vrot.lane.b32.xlu0 %v641, 64
    %v650 = vpop.permute.xlu0 %649
    %v651 = vsel %vm202, %v650, 0
    %653 = vmatprep.subr.mxu0 %v219
    %654 = vmatpush1.msra.mxu0 %v218
    %655 = vmatprep.subr.mxu0 %v221
    %656 = vmatpush1.msra.mxu0 %v220
    %657 = vmatprep.subr.mxu0 %v223
    %658 = vmatpush1.msra.mxu0 %v222
    %659 = vmatprep.subr.mxu0 %v225
    %660 = vmatpush1.msra.mxu0 %v224
    %661 = vmatprep.subr.mxu0 %v227
    %662 = vmatpush1.msra.mxu0 %v226
    %663 = vmatprep.subr.mxu0 %v229
    %664 = vmatpush1.msra.mxu0 %v228
    %665 = vmatprep.subr.mxu0 %v231
    %666 = vmatpush1.msra.mxu0 %v230
    %667 = vmatprep.subr.mxu0 %v233
    %668 = vmatpush1.msra.mxu0 %v232
    %669 = vmatprep.subr.mxu0 0.0
    %670 = vmatpush1.msra.mxu0 0.0
    %671 = vmatprep.subr.mxu0 0.0
    %672 = vmatpush1.msra.mxu0 0.0
    %673 = vmatprep.subr.mxu0 0.0
    %674 = vmatpush1.msra.mxu0 0.0
    %675 = vmatprep.subr.mxu0 0.0
    %676 = vmatpush1.msra.mxu0 0.0
    %677 = vmatprep.subr.mxu0 0.0
    %678 = vmatpush1.msra.mxu0 0.0
    %679 = vmatprep.subr.mxu0 0.0
    %680 = vmatpush1.msra.mxu0 0.0
    %681 = vmatprep.subr.mxu0 0.0
    %682 = vmatpush1.msra.mxu0 0.0
    %683 = vmatprep.subr.mxu0 0.0
    %684 = vmatpush1.msra.mxu0 0.0
    %685 = vmatprep.subr.mxu0 0.0
    %686 = vmatpush1.msra.mxu0 0.0
    %687 = vmatprep.subr.mxu0 0.0
    %688 = vmatpush1.msra.mxu0 0.0
    %689 = vmatprep.subr.mxu0 0.0
    %690 = vmatpush1.msra.mxu0 0.0
    %691 = vmatprep.subr.mxu0 0.0
    %692 = vmatpush1.msra.mxu0 0.0
    %693 = vmatprep.subr.mxu0 0.0
    %694 = vmatpush1.msra.mxu0 0.0
    %695 = vmatprep.subr.mxu0 0.0
    %696 = vmatpush1.msra.mxu0 0.0
    %697 = vmatprep.subr.mxu0 0.0
    %698 = vmatpush1.msra.mxu0 0.0
    %699 = vmatprep.subr.mxu0 0.0
    %700 = vmatpush1.msra.mxu0 0.0
    %701 = vmatprep.subr.mxu0 0.0
    %702 = vmatpush1.msra.mxu0 0.0
    %703 = vmatprep.subr.mxu0 0.0
    %704 = vmatpush1.msra.mxu0 0.0
    %705 = vmatprep.subr.mxu0 0.0
    %706 = vmatpush1.msra.mxu0 0.0
    %707 = vmatprep.subr.mxu0 0.0
    %708 = vmatpush1.msra.mxu0 0.0
    %709 = vmatprep.subr.mxu0 0.0
    %710 = vmatpush1.msra.mxu0 0.0
    %711 = vmatprep.subr.mxu0 0.0
    %712 = vmatpush1.msra.mxu0 0.0
    %713 = vmatprep.subr.mxu0 0.0
    %714 = vmatpush1.msra.mxu0 0.0
    %715 = vmatprep.subr.mxu0 0.0
    %716 = vmatpush1.msra.mxu0 0.0
    %717 = vmatprep.mubr.f32.mxu0 0.0
    %718 = vmatmul.mubr.f32.gmra.mrb[0].mxu0 %v651
    %v719 = vpop.f32.mrb[0].mxu0
    %v720 = vadd.f32 0.0, %v719
    %v721 = vpop.f32.mrb[0].mxu0
    %v722 = vadd.f32 0.0, %v721
    %723 = vdwg.mxu0
    %v724 = vadd.f32 %v646, %v720
    %v725 = vxor.u32 %v724, 2147483648
    %v726 = vmul.f32 %v725, 1.442695
    %v727 = vpow.pop %v726
    %v728 = vadd.f32 %v727, 1.0
    %v729 = vrcp.pop %v728
    %v730 = vmul.f32 1.0, %v729
    %v731 = vadd.f32 %v722, %v239
    %v732 = vmul.f32 %v730, %v731
    %v733 = vadd.f32 %v647, %v732
    %v734 = vtanh.pop %v733
    %v735 = vsub.f32 1.0, %v730
    %737 = vrot.lane.b32.xlu0 %v734, 64
    %v738 = vpop.permute.xlu0 %737
    %v740 = vmul.f32 %v735, %v738
    %v741 = vmul.f32 %v730, %v641
    %v742 = vadd.f32 %v740, %v741
    %v743 = vadd.f32 %v642, %v742
    %s744 = smul.u32 5, 2
    %s745 = smul.addr %s744, 8
    %s746 = scalar_lea.vmem [#allocation2], %s745
    %v747 = vld [vmem:[%s746] sm:$0xff]
    %v748 = vld [vmem:[%s746 + $0x8] sm:$0xff]
    %750 = vrot.lane.b32.xlu0 %v742, 64
    %v751 = vpop.permute.xlu0 %750
    %v752 = vsel %vm202, %v751, 0
    %754 = vmatprep.subr.mxu0 %v219
    %755 = vmatpush1.msra.mxu0 %v218
    %756 = vmatprep.subr.mxu0 %v221
    %757 = vmatpush1.msra.mxu0 %v220
    %758 = vmatprep.subr.mxu0 %v223
    %759 = vmatpush1.msra.mxu0 %v222
    %760 = vmatprep.subr.mxu0 %v225
    %761 = vmatpush1.msra.mxu0 %v224
    %762 = vmatprep.subr.mxu0 %v227
    %763 = vmatpush1.msra.mxu0 %v226
    %764 = vmatprep.subr.mxu0 %v229
    %765 = vmatpush1.msra.mxu0 %v228
    %766 = vmatprep.subr.mxu0 %v231
    %767 = vmatpush1.msra.mxu0 %v230
    %768 = vmatprep.subr.mxu0 %v233
    %769 = vmatpush1.msra.mxu0 %v232
    %770 = vmatprep.subr.mxu0 0.0
    %771 = vmatpush1.msra.mxu0 0.0
    %772 = vmatprep.subr.mxu0 0.0
    %773 = vmatpush1.msra.mxu0 0.0
    %774 = vmatprep.subr.mxu0 0.0
    %775 = vmatpush1.msra.mxu0 0.0
    %776 = vmatprep.subr.mxu0 0.0
    %777 = vmatpush1.msra.mxu0 0.0
    %778 = vmatprep.subr.mxu0 0.0
    %779 = vmatpush1.msra.mxu0 0.0
    %780 = vmatprep.subr.mxu0 0.0
    %781 = vmatpush1.msra.mxu0 0.0
    %782 = vmatprep.subr.mxu0 0.0
    %783 = vmatpush1.msra.mxu0 0.0
    %784 = vmatprep.subr.mxu0 0.0
    %785 = vmatpush1.msra.mxu0 0.0
    %786 = vmatprep.subr.mxu0 0.0
    %787 = vmatpush1.msra.mxu0 0.0
    %788 = vmatprep.subr.mxu0 0.0
    %789 = vmatpush1.msra.mxu0 0.0
    %790 = vmatprep.subr.mxu0 0.0
    %791 = vmatpush1.msra.mxu0 0.0
    %792 = vmatprep.subr.mxu0 0.0
    %793 = vmatpush1.msra.mxu0 0.0
    %794 = vmatprep.subr.mxu0 0.0
    %795 = vmatpush1.msra.mxu0 0.0
    %796 = vmatprep.subr.mxu0 0.0
    %797 = vmatpush1.msra.mxu0 0.0
    %798 = vmatprep.subr.mxu0 0.0
    %799 = vmatpush1.msra.mxu0 0.0
    %800 = vmatprep.subr.mxu0 0.0
    %801 = vmatpush1.msra.mxu0 0.0
    %802 = vmatprep.subr.mxu0 0.0
    %803 = vmatpush1.msra.mxu0 0.0
    %804 = vmatprep.subr.mxu0 0.0
    %805 = vmatpush1.msra.mxu0 0.0
    %806 = vmatprep.subr.mxu0 0.0
    %807 = vmatpush1.msra.mxu0 0.0
    %808 = vmatprep.subr.mxu0 0.0
    %809 = vmatpush1.msra.mxu0 0.0
    %810 = vmatprep.subr.mxu0 0.0
    %811 = vmatpush1.msra.mxu0 0.0
    %812 = vmatprep.subr.mxu0 0.0
    %813 = vmatpush1.msra.mxu0 0.0
    %814 = vmatprep.subr.mxu0 0.0
    %815 = vmatpush1.msra.mxu0 0.0
    %816 = vmatprep.subr.mxu0 0.0
    %817 = vmatpush1.msra.mxu0 0.0
    %818 = vmatprep.mubr.f32.mxu0 0.0
    %819 = vmatmul.mubr.f32.gmra.mrb[0].mxu0 %v752
    %v820 = vpop.f32.mrb[0].mxu0
    %v821 = vadd.f32 0.0, %v820
    %v822 = vpop.f32.mrb[0].mxu0
    %v823 = vadd.f32 0.0, %v822
    %824 = vdwg.mxu0
    %v825 = vadd.f32 %v747, %v821
    %v826 = vxor.u32 %v825, 2147483648
    %v827 = vmul.f32 %v826, 1.442695
    %v828 = vpow.pop %v827
    %v829 = vadd.f32 %v828, 1.0
    %v830 = vrcp.pop %v829
    %v831 = vmul.f32 1.0, %v830
    %v832 = vadd.f32 %v823, %v239
    %v833 = vmul.f32 %v831, %v832
    %v834 = vadd.f32 %v748, %v833
    %v835 = vtanh.pop %v834
    %v836 = vsub.f32 1.0, %v831
    %838 = vrot.lane.b32.xlu0 %v835, 64
    %v839 = vpop.permute.xlu0 %838
    %v841 = vmul.f32 %v836, %v839
    %v842 = vmul.f32 %v831, %v742
    %v843 = vadd.f32 %v841, %v842
    %v844 = vadd.f32 %v743, %v843
    %s845 = smul.u32 6, 2
    %s846 = smul.addr %s845, 8
    %s847 = scalar_lea.vmem [#allocation2], %s846
    %v848 = vld [vmem:[%s847] sm:$0xff]
    %v849 = vld [vmem:[%s847 + $0x8] sm:$0xff]
    %851 = vrot.lane.b32.xlu0 %v843, 64
    %v852 = vpop.permute.xlu0 %851
    %v853 = vsel %vm202, %v852, 0
    %855 = vmatprep.subr.mxu0 %v219
    %856 = vmatpush1.msra.mxu0 %v218
    %857 = vmatprep.subr.mxu0 %v221
    %858 = vmatpush1.msra.mxu0 %v220
    %859 = vmatprep.subr.mxu0 %v223
    %860 = vmatpush1.msra.mxu0 %v222
    %861 = vmatprep.subr.mxu0 %v225
    %862 = vmatpush1.msra.mxu0 %v224
    %863 = vmatprep.subr.mxu0 %v227
    %864 = vmatpush1.msra.mxu0 %v226
    %865 = vmatprep.subr.mxu0 %v229
    %866 = vmatpush1.msra.mxu0 %v228
    %867 = vmatprep.subr.mxu0 %v231
    %868 = vmatpush1.msra.mxu0 %v230
    %869 = vmatprep.subr.mxu0 %v233
    %870 = vmatpush1.msra.mxu0 %v232
    %871 = vmatprep.subr.mxu0 0.0
    %872 = vmatpush1.msra.mxu0 0.0
    %873 = vmatprep.subr.mxu0 0.0
    %874 = vmatpush1.msra.mxu0 0.0
    %875 = vmatprep.subr.mxu0 0.0
    %876 = vmatpush1.msra.mxu0 0.0
    %877 = vmatprep.subr.mxu0 0.0
    %878 = vmatpush1.msra.mxu0 0.0
    %879 = vmatprep.subr.mxu0 0.0
    %880 = vmatpush1.msra.mxu0 0.0
    %881 = vmatprep.subr.mxu0 0.0
    %882 = vmatpush1.msra.mxu0 0.0
    %883 = vmatprep.subr.mxu0 0.0
    %884 = vmatpush1.msra.mxu0 0.0
    %885 = vmatprep.subr.mxu0 0.0
    %886 = vmatpush1.msra.mxu0 0.0
    %887 = vmatprep.subr.mxu0 0.0
    %888 = vmatpush1.msra.mxu0 0.0
    %889 = vmatprep.subr.mxu0 0.0
    %890 = vmatpush1.msra.mxu0 0.0
    %891 = vmatprep.subr.mxu0 0.0
    %892 = vmatpush1.msra.mxu0 0.0
    %893 = vmatprep.subr.mxu0 0.0
    %894 = vmatpush1.msra.mxu0 0.0
    %895 = vmatprep.subr.mxu0 0.0
    %896 = vmatpush1.msra.mxu0 0.0
    %897 = vmatprep.subr.mxu0 0.0
    %898 = vmatpush1.msra.mxu0 0.0
    %899 = vmatprep.subr.mxu0 0.0
    %900 = vmatpush1.msra.mxu0 0.0
    %901 = vmatprep.subr.mxu0 0.0
    %902 = vmatpush1.msra.mxu0 0.0
    %903 = vmatprep.subr.mxu0 0.0
    %904 = vmatpush1.msra.mxu0 0.0
    %905 = vmatprep.subr.mxu0 0.0
    %906 = vmatpush1.msra.mxu0 0.0
    %907 = vmatprep.subr.mxu0 0.0
    %908 = vmatpush1.msra.mxu0 0.0
    %909 = vmatprep.subr.mxu0 0.0
    %910 = vmatpush1.msra.mxu0 0.0
    %911 = vmatprep.subr.mxu0 0.0
    %912 = vmatpush1.msra.mxu0 0.0
    %913 = vmatprep.subr.mxu0 0.0
    %914 = vmatpush1.msra.mxu0 0.0
    %915 = vmatprep.subr.mxu0 0.0
    %916 = vmatpush1.msra.mxu0 0.0
    %917 = vmatprep.subr.mxu0 0.0
    %918 = vmatpush1.msra.mxu0 0.0
    %919 = vmatprep.mubr.f32.mxu0 0.0
    %920 = vmatmul.mubr.f32.gmra.mrb[0].mxu0 %v853
    %v921 = vpop.f32.mrb[0].mxu0
    %v922 = vadd.f32 0.0, %v921
    %v923 = vpop.f32.mrb[0].mxu0
    %v924 = vadd.f32 0.0, %v923
    %925 = vdwg.mxu0
    %v926 = vadd.f32 %v848, %v922
    %v927 = vxor.u32 %v926, 2147483648
    %v928 = vmul.f32 %v927, 1.442695
    %v929 = vpow.pop %v928
    %v930 = vadd.f32 %v929, 1.0
    %v931 = vrcp.pop %v930
    %v932 = vmul.f32 1.0, %v931
    %v933 = vadd.f32 %v924, %v239
    %v934 = vmul.f32 %v932, %v933
    %v935 = vadd.f32 %v849, %v934
    %v936 = vtanh.pop %v935
    %v937 = vsub.f32 1.0, %v932
    %939 = vrot.lane.b32.xlu0 %v936, 64
    %v940 = vpop.permute.xlu0 %939
    %v942 = vmul.f32 %v937, %v940
    %v943 = vmul.f32 %v932, %v843
    %v944 = vadd.f32 %v942, %v943
    %v945 = vadd.f32 %v844, %v944
    %s946 = smul.u32 7, 2
    %s947 = smul.addr %s946, 8
    %s948 = scalar_lea.vmem [#allocation2], %s947
    %v949 = vld [vmem:[%s948] sm:$0xff]
    %v950 = vld [vmem:[%s948 + $0x8] sm:$0xff]
    %952 = vrot.lane.b32.xlu0 %v944, 64
    %v953 = vpop.permute.xlu0 %952
    %v954 = vsel %vm202, %v953, 0
    %956 = vmatprep.subr.mxu0 %v219
    %957 = vmatpush1.msra.mxu0 %v218
    %958 = vmatprep.subr.mxu0 %v221
    %959 = vmatpush1.msra.mxu0 %v220
    %960 = vmatprep.subr.mxu0 %v223
    %961 = vmatpush1.msra.mxu0 %v222
    %962 = vmatprep.subr.mxu0 %v225
    %963 = vmatpush1.msra.mxu0 %v224
    %964 = vmatprep.subr.mxu0 %v227
    %965 = vmatpush1.msra.mxu0 %v226
    %966 = vmatprep.subr.mxu0 %v229
    %967 = vmatpush1.msra.mxu0 %v228
    %968 = vmatprep.subr.mxu0 %v231
    %969 = vmatpush1.msra.mxu0 %v230
    %970 = vmatprep.subr.mxu0 %v233
    %971 = vmatpush1.msra.mxu0 %v232
    %972 = vmatprep.subr.mxu0 0.0
    %973 = vmatpush1.msra.mxu0 0.0
    %974 = vmatprep.subr.mxu0 0.0
    %975 = vmatpush1.msra.mxu0 0.0
    %976 = vmatprep.subr.mxu0 0.0
    %977 = vmatpush1.msra.mxu0 0.0
    %978 = vmatprep.subr.mxu0 0.0
    %979 = vmatpush1.msra.mxu0 0.0
    %980 = vmatprep.subr.mxu0 0.0
    %981 = vmatpush1.msra.mxu0 0.0
    %982 = vmatprep.subr.mxu0 0.0
    %983 = vmatpush1.msra.mxu0 0.0
    %984 = vmatprep.subr.mxu0 0.0
    %985 = vmatpush1.msra.mxu0 0.0
    %986 = vmatprep.subr.mxu0 0.0
    %987 = vmatpush1.msra.mxu0 0.0
    %988 = vmatprep.subr.mxu0 0.0
    %989 = vmatpush1.msra.mxu0 0.0
    %990 = vmatprep.subr.mxu0 0.0
    %991 = vmatpush1.msra.mxu0 0.0
    %992 = vmatprep.subr.mxu0 0.0
    %993 = vmatpush1.msra.mxu0 0.0
    %994 = vmatprep.subr.mxu0 0.0
    %995 = vmatpush1.msra.mxu0 0.0
    %996 = vmatprep.subr.mxu0 0.0
    %997 = vmatpush1.msra.mxu0 0.0
    %998 = vmatprep.subr.mxu0 0.0
    %999 = vmatpush1.msra.mxu0 0.0
    %1000 = vmatprep.subr.mxu0 0.0
    %1001 = vmatpush1.msra.mxu0 0.0
    %1002 = vmatprep.subr.mxu0 0.0
    %1003 = vmatpush1.msra.mxu0 0.0
    %1004 = vmatprep.subr.mxu0 0.0
    %1005 = vmatpush1.msra.mxu0 0.0
    %1006 = vmatprep.subr.mxu0 0.0
    %1007 = vmatpush1.msra.mxu0 0.0
    %1008 = vmatprep.subr.mxu0 0.0
    %1009 = vmatpush1.msra.mxu0 0.0
    %1010 = vmatprep.subr.mxu0 0.0
    %1011 = vmatpush1.msra.mxu0 0.0
    %1012 = vmatprep.subr.mxu0 0.0
    %1013 = vmatpush1.msra.mxu0 0.0
    %1014 = vmatprep.subr.mxu0 0.0
    %1015 = vmatpush1.msra.mxu0 0.0
    %1016 = vmatprep.subr.mxu0 0.0
    %1017 = vmatpush1.msra.mxu0 0.0
    %1018 = vmatprep.subr.mxu0 0.0
    %1019 = vmatpush1.msra.mxu0 0.0
    %1020 = vmatprep.mubr.f32.mxu0 0.0
    %1021 = vmatmul.mubr.f32.gmra.mrb[0].mxu0 %v954
    %v1022 = vpop.f32.mrb[0].mxu0
    %v1023 = vadd.f32 0.0, %v1022
    %v1024 = vpop.f32.mrb[0].mxu0
    %v1025 = vadd.f32 0.0, %v1024
    %1026 = vdwg.mxu0
    %v1027 = vadd.f32 %v949, %v1023
    %v1028 = vxor.u32 %v1027, 2147483648
    %v1029 = vmul.f32 %v1028, 1.442695
    %v1030 = vpow.pop %v1029
    %v1031 = vadd.f32 %v1030, 1.0
    %v1032 = vrcp.pop %v1031
    %v1033 = vmul.f32 1.0, %v1032
    %v1034 = vadd.f32 %v1025, %v239
    %v1035 = vmul.f32 %v1033, %v1034
    %v1036 = vadd.f32 %v950, %v1035
    %v1037 = vtanh.pop %v1036
    %v1038 = vsub.f32 1.0, %v1033
    %1040 = vrot.lane.b32.xlu0 %v1037, 64
    %v1041 = vpop.permute.xlu0 %1040
    %v1043 = vmul.f32 %v1038, %v1041
    %v1044 = vmul.f32 %v1033, %v944
    %v1045 = vadd.f32 %v1043, %v1044
    %v1046 = vadd.f32 %v945, %v1045
    %1048 = vrot.lane.b32.xlu0 %v1046, 64
    %v1049 = vpop.permute.xlu0 %1048
    %1051 = vst.msk [vmem:[#allocation6] sm:$0xff] %vm202, %v1049
    // Predicated region
    $region26: #{tpu_custom_call.1} parent=1 // pred_check
      _
    $region27: #{tpu_custom_call.1} parent=1 // pred_check_branch
      %1053 = sbr.rel (0) target = $region29
    $region28: #{tpu_custom_call.1} parent=1 // pred_region
      %s1055 = ssub.s32 128, 128
      %1056 = vsyncadd [#allocation5], %s1055
      %s1058 = sshll.u32 [#allocation6], 4
      %s1059 = int_to_ptr.vmem [resolvable:$true] %s1058
      %1061 = dma.vmem_to_hbm [thread:$0]  %s1059, 128, %s5, [#allocation5]
    $region29: #{tpu_custom_call.1} parent=1 // pred_fallthru
      _
    // Predicated region
    $region30: #{tpu_custom_call.1} parent=1 // pred_check
      _
    $region31: #{tpu_custom_call.1} parent=1 // pred_check_branch
      %1063 = sbr.rel (0) target = $region33
    $region32: #{tpu_custom_call.1} parent=1 // pred_region
      %1064 = dma.done [#allocation5], 128
    $region33: #{tpu_custom_call.1} parent=1 // pred_fallthru
      _
    %1065 = vsyncpa [#allocation4], 1
    %1066 = vsyncpa [#allocation5], 1

</llo_original>
